<compile_context>
chip_gen: v5e
topology: v5e:2x2
jax: 0.10.0
libtpu: 0.0.40
codegen_flags: <defaults>
</compile_context>

<pallas_src>
import numpy as np
import jax
import jax.numpy as jnp
from jax.experimental import pallas as pl
from jax.experimental.pallas import tpu as pltpu

EMB_CHANNELS = 128     # PositionalEmbedding num_channels
MAX_POSITIONS = 10000
HIDDEN_SIZE = 256
NUM_HIDDEN = 4
LANE = 128


def _cond_mlp_kernel(xp_ref, p_ref, freqs_ref,
                     wxp_ref, wc_ref, ws_ref, bin_ref,
                     wh_ref, bh_ref, wo_ref, bo_ref,
                     out_ref):
    # --- PositionalEmbedding(p), endpoint=True (freqs precomputed in wrapper).
    ang = p_ref[...] * freqs_ref[...]            # (bm,1)*(1,E2) -> (bm, E2)
    cos_e = jnp.cos(ang)
    sin_e = jnp.sin(ang)

    # --- map_inputs on cat([x, prior, cos, sin]) as a split-K sum of matmuls.
    h = jnp.dot(xp_ref[...], wxp_ref[...], preferred_element_type=jnp.float32)
    h = h + jnp.dot(cos_e, wc_ref[...], preferred_element_type=jnp.float32)
    h = h + jnp.dot(sin_e, ws_ref[...], preferred_element_type=jnp.float32)
    h = h + bin_ref[...]
    h = h * jax.nn.sigmoid(h)                    # SiLU

    # --- hidden stack (statically unrolled, num_hidden = 4).
    # TODO(synk): torch.nn.Dropout(0.1) is identity in eval mode; training-time
    # stochastic dropout is not implemented here.
    for i in range(wh_ref.shape[0]):
        h = jnp.dot(h, wh_ref[i], preferred_element_type=jnp.float32) + bh_ref[i]
        h = h * jax.nn.sigmoid(h)

    # --- map_output + tanh (output features padded to a lane-dense width).
    out = jnp.dot(h, wo_ref[...], preferred_element_type=jnp.float32) + bo_ref[...]
    out_ref[...] = jnp.tanh(out)


def conditional_mlp_forward(x, prior, p, params):
    """x: (B, d*d), prior: (B, d*d*d), p: (B,).  params in PyTorch layout."""
    W_in, b_in, Wh, bh, Wo, bo = params
    B, x_dim = x.shape
    prior_dim = prior.shape[1]
    H = W_in.shape[0]
    NH = Wh.shape[0]
    E2 = EMB_CHANNELS // 2
    xp_dim = x_dim + prior_dim

    # Positional-embedding frequencies (endpoint=True) — tiny constant, hoisted.
    k = jnp.arange(E2, dtype=jnp.float32) / (E2 - 1)
    freqs = ((1.0 / MAX_POSITIONS) ** k).reshape(1, E2).astype(jnp.float32)

    # Split map_inputs weight along the concat axis ([x|prior] | cos | sin) and
    # pre-transpose everything so the kernel computes plain `act @ W`.
    W_in = W_in.astype(jnp.float32)
    wxp_t = W_in[:, :xp_dim].T                                  # (xp_dim, H)
    wc_t = W_in[:, xp_dim:xp_dim + E2].T                        # (E2, H)
    ws_t = W_in[:, xp_dim + E2:].T                              # (E2, H)
    wh_t = jnp.transpose(Wh.astype(jnp.float32), (0, 2, 1))     # (NH, H, H)
    bin2 = b_in.astype(jnp.float32).reshape(1, H)
    bh2 = bh.astype(jnp.float32).reshape(NH, 1, H)

    # Pad the output feature dim to a multiple of 128 -> unmasked, lane-dense
    # stores. Padded columns multiply zero weights, so tanh(0)=0 there.
    n_pad = -(-x_dim // LANE) * LANE
    wo_t = jnp.pad(Wo.astype(jnp.float32).T, ((0, 0), (0, n_pad - x_dim)))  # (H, n_pad)
    bo2 = jnp.pad(bo.astype(jnp.float32).reshape(1, x_dim),
                  ((0, 0), (0, n_pad - x_dim)))                              # (1, n_pad)

    # Batch tiling: pad to a sublane multiple; single lane-dense tile for small
    # B, "parallel" batch grid for large B (uses both v7x TensorCores).
    bm = min(max(8, -(-B // 8) * 8), 256)
    B_pad = -(-B // bm) * bm

    def pad_rows(a):
        return jnp.pad(a, ((0, B_pad - a.shape[0]),) + ((0, 0),) * (a.ndim - 1))

    xp_p = pad_rows(jnp.concatenate(
        [x.astype(jnp.float32), prior.astype(jnp.float32)], axis=1))  # (B_pad, xp_dim)
    p_col = pad_rows(p.astype(jnp.float32).reshape(B, 1))             # (B_pad, 1)

    out = pl.pallas_call(
        _cond_mlp_kernel,
        out_shape=jax.ShapeDtypeStruct((B_pad, n_pad), jnp.float32),
        grid_spec=pltpu.PrefetchScalarGridSpec(
            num_scalar_prefetch=0,
            grid=(B_pad // bm,),
            in_specs=[
                pl.BlockSpec((bm, xp_dim), lambda i: (i, 0)),       # [x|prior]
                pl.BlockSpec((bm, 1), lambda i: (i, 0)),            # p (column)
                pl.BlockSpec((1, E2), lambda i: (0, 0)),            # emb freqs
                pl.BlockSpec((xp_dim, H), lambda i: (0, 0)),        # W_in[:, x|prior].T
                pl.BlockSpec((E2, H), lambda i: (0, 0)),            # W_in[:, cos].T
                pl.BlockSpec((E2, H), lambda i: (0, 0)),            # W_in[:, sin].T
                pl.BlockSpec((1, H), lambda i: (0, 0)),             # b_in
                pl.BlockSpec((NH, H, H), lambda i: (0, 0, 0)),      # hidden W.T stack
                pl.BlockSpec((NH, 1, H), lambda i: (0, 0, 0)),      # hidden b stack
                pl.BlockSpec((H, n_pad), lambda i: (0, 0)),         # W_out.T (padded)
                pl.BlockSpec((1, n_pad), lambda i: (0, 0)),         # b_out   (padded)
            ],
            out_specs=pl.BlockSpec((bm, n_pad), lambda i: (i, 0)),
        ),
        compiler_params=pltpu.CompilerParams(
            dimension_semantics=("parallel",)),
    )(xp_p, p_col, freqs, wxp_t, wc_t, ws_t, bin2, wh_t, bh2, wo_t, bo2)

    return out[:B, :x_dim]


def _reference(x, prior, p, params):
    """Pure-JAX reference mirroring the PyTorch forward (eval mode)."""
    W_in, b_in, Wh, bh, Wo, bo = params
    E2 = EMB_CHANNELS // 2
    k = jnp.arange(E2, dtype=jnp.float32) / (E2 - 1)
    freqs = (1.0 / MAX_POSITIONS) ** k
    ang = p[:, None] * freqs[None, :]
    emb = jnp.concatenate([jnp.cos(ang), jnp.sin(ang)], axis=1)
    hp = jax.lax.Precision.HIGHEST
    h = jnp.concatenate([x, prior, emb], axis=1)
    h = jax.nn.silu(jnp.dot(h, W_in.T, precision=hp) + b_in)
    for i in range(Wh.shape[0]):
        h = jax.nn.silu(jnp.dot(h, Wh[i].T, precision=hp) + bh[i])
    return jnp.tanh(jnp.dot(h, Wo.T, precision=hp) + bo)


if __name__ == "__main__":
    B, d = 8, 4
    X_DIM = d * d            # 16
    PRIOR_DIM = d * d * d    # 64
    IN_DIM = X_DIM + PRIOR_DIM + EMB_CHANNELS

    key = jax.random.PRNGKey(0)
    ks = jax.random.split(key, 9)

    x = jax.random.normal(ks[0], (B, X_DIM), dtype=jnp.float32)
    prior = jax.random.normal(ks[1], (B, PRIOR_DIM), dtype=jnp.float32)
    p = jax.random.uniform(ks[2], (B,), dtype=jnp.float32, minval=0.0, maxval=10.0)

    # Deterministic synthetic parameters (PyTorch Linear layout: (out, in)).
    W_in = jax.random.normal(ks[3], (HIDDEN_SIZE, IN_DIM), jnp.float32) / np.sqrt(IN_DIM)
    b_in = jax.random.normal(ks[4], (HIDDEN_SIZE,), jnp.float32) * 0.01
    Wh = jax.random.normal(ks[5], (NUM_HIDDEN, HIDDEN_SIZE, HIDDEN_SIZE), jnp.float32) / np.sqrt(HIDDEN_SIZE)
    bh = jax.random.normal(ks[6], (NUM_HIDDEN, HIDDEN_SIZE), jnp.float32) * 0.01
    Wo = jax.random.normal(ks[7], (X_DIM, HIDDEN_SIZE), jnp.float32) / np.sqrt(HIDDEN_SIZE)
    bo = jax.random.normal(ks[8], (X_DIM,), jnp.float32) * 0.01
    params = (W_in, b_in, Wh, bh, Wo, bo)

    out = conditional_mlp_forward(x, prior, p, params)
    out = jax.block_until_ready(out)

    ref = _reference(x, prior, p, params)
    np.testing.assert_allclose(np.asarray(out), np.asarray(ref), rtol=1e-4, atol=1e-4)

    print("KERNEL_OK")
</pallas_src>

<mosaic_0001>
module attributes {stable_mosaic.version = 11 : i64} {
  func.func @_cond_mlp_kernel(%arg0: i32, %arg1: memref<8x80xf32, #tpu.memory_space<vmem>>, %arg2: memref<8x1xf32, #tpu.memory_space<vmem>>, %arg3: memref<1x64xf32, #tpu.memory_space<vmem>>, %arg4: memref<80x256xf32, #tpu.memory_space<vmem>>, %arg5: memref<64x256xf32, #tpu.memory_space<vmem>>, %arg6: memref<64x256xf32, #tpu.memory_space<vmem>>, %arg7: memref<1x256xf32, #tpu.memory_space<vmem>>, %arg8: memref<4x256x256xf32, #tpu.memory_space<vmem>>, %arg9: memref<4x1x256xf32, #tpu.memory_space<vmem>>, %arg10: memref<256x128xf32, #tpu.memory_space<vmem>>, %arg11: memref<1x128xf32, #tpu.memory_space<vmem>>, %arg12: memref<8x128xf32, #tpu.memory_space<vmem>>) attributes {dimension_semantics = [#tpu.dimension_semantics<parallel>], iteration_bounds = array<i64: 1>, scalar_prefetch = 0 : i64, scratch_operands = 0 : i64, tpu.core_type = #tpu.core_type<tc>, window_params = [{transform_indices = @transform_0, window_bounds = array<i64: 8, 80>}, {transform_indices = @transform_1, window_bounds = array<i64: 8, 1>}, {pipeline_mode = #tpu.pipeline_mode<synchronous>, transform_indices = @transform_2, window_bounds = array<i64: 1, 64>}, {pipeline_mode = #tpu.pipeline_mode<synchronous>, transform_indices = @transform_3, window_bounds = array<i64: 80, 256>}, {pipeline_mode = #tpu.pipeline_mode<synchronous>, transform_indices = @transform_4, window_bounds = array<i64: 64, 256>}, {pipeline_mode = #tpu.pipeline_mode<synchronous>, transform_indices = @transform_5, window_bounds = array<i64: 64, 256>}, {pipeline_mode = #tpu.pipeline_mode<synchronous>, transform_indices = @transform_6, window_bounds = array<i64: 1, 256>}, {pipeline_mode = #tpu.pipeline_mode<synchronous>, transform_indices = @transform_7, window_bounds = array<i64: 4, 256, 256>}, {pipeline_mode = #tpu.pipeline_mode<synchronous>, transform_indices = @transform_8, window_bounds = array<i64: 4, 1, 256>}, {pipeline_mode = #tpu.pipeline_mode<synchronous>, transform_indices = @transform_9, window_bounds = array<i64: 256, 128>}, {pipeline_mode = #tpu.pipeline_mode<synchronous>, transform_indices = @transform_10, window_bounds = array<i64: 1, 128>}, {transform_indices = @transform_11, window_bounds = array<i64: 8, 128>}]} {
    %c0 = arith.constant 0 : index
    %c0_0 = arith.constant 0 : index
    %0 = vector.load %arg2[%c0, %c0_0] : memref<8x1xf32, #tpu.memory_space<vmem>>, vector<8x1xf32>
    %c0_1 = arith.constant 0 : index
    %c0_2 = arith.constant 0 : index
    %1 = vector.load %arg3[%c0_1, %c0_2] : memref<1x64xf32, #tpu.memory_space<vmem>>, vector<1x64xf32>
    %2 = vector.broadcast %0 : vector<8x1xf32> to vector<8x64xf32>
    %3 = vector.broadcast %1 : vector<1x64xf32> to vector<8x64xf32>
    %4 = arith.mulf %2, %3 : vector<8x64xf32>
    %5 = math.cos %4 : vector<8x64xf32>
    %6 = math.sin %4 : vector<8x64xf32>
    %c0_3 = arith.constant 0 : index
    %c0_4 = arith.constant 0 : index
    %7 = vector.load %arg1[%c0_3, %c0_4] : memref<8x80xf32, #tpu.memory_space<vmem>>, vector<8x80xf32>
    %c0_5 = arith.constant 0 : index
    %c0_6 = arith.constant 0 : index
    %8 = vector.load %arg4[%c0_5, %c0_6] : memref<80x256xf32, #tpu.memory_space<vmem>>, vector<80x256xf32>
    %cst = arith.constant dense<0.000000e+00> : vector<8x256xf32>
    %9 = tpu.matmul %7, %8, %cst {dimension_numbers = #tpu.dot_dimension_numbers<[1], [0], [0], [1], [0, 0, 1, 1], [], []>} : vector<8x80xf32>, vector<80x256xf32>, vector<8x256xf32> -> vector<8x256xf32>
    %c0_7 = arith.constant 0 : index
    %c0_8 = arith.constant 0 : index
    %10 = vector.load %arg5[%c0_7, %c0_8] : memref<64x256xf32, #tpu.memory_space<vmem>>, vector<64x256xf32>
    %cst_9 = arith.constant dense<0.000000e+00> : vector<8x256xf32>
    %11 = tpu.matmul %5, %10, %cst_9 {dimension_numbers = #tpu.dot_dimension_numbers<[1], [0], [0], [1], [0, 0, 1, 1], [], []>} : vector<8x64xf32>, vector<64x256xf32>, vector<8x256xf32> -> vector<8x256xf32>
    %12 = arith.addf %9, %11 : vector<8x256xf32>
    %c0_10 = arith.constant 0 : index
    %c0_11 = arith.constant 0 : index
    %13 = vector.load %arg6[%c0_10, %c0_11] : memref<64x256xf32, #tpu.memory_space<vmem>>, vector<64x256xf32>
    %cst_12 = arith.constant dense<0.000000e+00> : vector<8x256xf32>
    %14 = tpu.matmul %6, %13, %cst_12 {dimension_numbers = #tpu.dot_dimension_numbers<[1], [0], [0], [1], [0, 0, 1, 1], [], []>} : vector<8x64xf32>, vector<64x256xf32>, vector<8x256xf32> -> vector<8x256xf32>
    %15 = arith.addf %12, %14 : vector<8x256xf32>
    %c0_13 = arith.constant 0 : index
    %c0_14 = arith.constant 0 : index
    %16 = vector.load %arg7[%c0_13, %c0_14] : memref<1x256xf32, #tpu.memory_space<vmem>>, vector<1x256xf32>
    %17 = vector.broadcast %16 : vector<1x256xf32> to vector<8x256xf32>
    %18 = arith.addf %15, %17 : vector<8x256xf32>
    %19 = arith.negf %18 : vector<8x256xf32>
    %20 = math.exp %19 : vector<8x256xf32>
    %cst_15 = arith.constant 1.000000e+00 : f32
    %21 = vector.broadcast %cst_15 : f32 to vector<8x256xf32>
    %22 = arith.addf %21, %20 : vector<8x256xf32>
    %23 = arith.divf %21, %22 : vector<8x256xf32>
    %24 = arith.mulf %18, %23 : vector<8x256xf32>
    %c0_16 = arith.constant 0 : index
    %c0_17 = arith.constant 0 : index
    %c0_18 = arith.constant 0 : index
    %25 = vector.load %arg8[%c0_16, %c0_17, %c0_18] : memref<4x256x256xf32, #tpu.memory_space<vmem>>, vector<1x256x256xf32>
    %26 = vector.shape_cast %25 : vector<1x256x256xf32> to vector<256x256xf32>
    %cst_19 = arith.constant dense<0.000000e+00> : vector<8x256xf32>
    %27 = tpu.matmul %24, %26, %cst_19 {dimension_numbers = #tpu.dot_dimension_numbers<[1], [0], [0], [1], [0, 0, 1, 1], [], []>} : vector<8x256xf32>, vector<256x256xf32>, vector<8x256xf32> -> vector<8x256xf32>
    %c0_20 = arith.constant 0 : index
    %c0_21 = arith.constant 0 : index
    %c0_22 = arith.constant 0 : index
    %28 = vector.load %arg9[%c0_20, %c0_21, %c0_22] : memref<4x1x256xf32, #tpu.memory_space<vmem>>, vector<1x1x256xf32>
    %29 = vector.shape_cast %28 : vector<1x1x256xf32> to vector<1x256xf32>
    %30 = vector.broadcast %29 : vector<1x256xf32> to vector<8x256xf32>
    %31 = arith.addf %27, %30 : vector<8x256xf32>
    %32 = arith.negf %31 : vector<8x256xf32>
    %33 = math.exp %32 : vector<8x256xf32>
    %cst_23 = arith.constant 1.000000e+00 : f32
    %34 = vector.broadcast %cst_23 : f32 to vector<8x256xf32>
    %35 = arith.addf %34, %33 : vector<8x256xf32>
    %36 = arith.divf %34, %35 : vector<8x256xf32>
    %37 = arith.mulf %31, %36 : vector<8x256xf32>
    %c1 = arith.constant 1 : index
    %c0_24 = arith.constant 0 : index
    %c0_25 = arith.constant 0 : index
    %38 = vector.load %arg8[%c1, %c0_24, %c0_25] : memref<4x256x256xf32, #tpu.memory_space<vmem>>, vector<1x256x256xf32>
    %39 = vector.shape_cast %38 : vector<1x256x256xf32> to vector<256x256xf32>
    %cst_26 = arith.constant dense<0.000000e+00> : vector<8x256xf32>
    %40 = tpu.matmul %37, %39, %cst_26 {dimension_numbers = #tpu.dot_dimension_numbers<[1], [0], [0], [1], [0, 0, 1, 1], [], []>} : vector<8x256xf32>, vector<256x256xf32>, vector<8x256xf32> -> vector<8x256xf32>
    %c1_27 = arith.constant 1 : index
    %c0_28 = arith.constant 0 : index
    %c0_29 = arith.constant 0 : index
    %41 = vector.load %arg9[%c1_27, %c0_28, %c0_29] : memref<4x1x256xf32, #tpu.memory_space<vmem>>, vector<1x1x256xf32>
    %42 = vector.shape_cast %41 : vector<1x1x256xf32> to vector<1x256xf32>
    %43 = vector.broadcast %42 : vector<1x256xf32> to vector<8x256xf32>
    %44 = arith.addf %40, %43 : vector<8x256xf32>
    %45 = arith.negf %44 : vector<8x256xf32>
    %46 = math.exp %45 : vector<8x256xf32>
    %cst_30 = arith.constant 1.000000e+00 : f32
    %47 = vector.broadcast %cst_30 : f32 to vector<8x256xf32>
    %48 = arith.addf %47, %46 : vector<8x256xf32>
    %49 = arith.divf %47, %48 : vector<8x256xf32>
    %50 = arith.mulf %44, %49 : vector<8x256xf32>
    %c2 = arith.constant 2 : index
    %c0_31 = arith.constant 0 : index
    %c0_32 = arith.constant 0 : index
    %51 = vector.load %arg8[%c2, %c0_31, %c0_32] : memref<4x256x256xf32, #tpu.memory_space<vmem>>, vector<1x256x256xf32>
    %52 = vector.shape_cast %51 : vector<1x256x256xf32> to vector<256x256xf32>
    %cst_33 = arith.constant dense<0.000000e+00> : vector<8x256xf32>
    %53 = tpu.matmul %50, %52, %cst_33 {dimension_numbers = #tpu.dot_dimension_numbers<[1], [0], [0], [1], [0, 0, 1, 1], [], []>} : vector<8x256xf32>, vector<256x256xf32>, vector<8x256xf32> -> vector<8x256xf32>
    %c2_34 = arith.constant 2 : index
    %c0_35 = arith.constant 0 : index
    %c0_36 = arith.constant 0 : index
    %54 = vector.load %arg9[%c2_34, %c0_35, %c0_36] : memref<4x1x256xf32, #tpu.memory_space<vmem>>, vector<1x1x256xf32>
    %55 = vector.shape_cast %54 : vector<1x1x256xf32> to vector<1x256xf32>
    %56 = vector.broadcast %55 : vector<1x256xf32> to vector<8x256xf32>
    %57 = arith.addf %53, %56 : vector<8x256xf32>
    %58 = arith.negf %57 : vector<8x256xf32>
    %59 = math.exp %58 : vector<8x256xf32>
    %cst_37 = arith.constant 1.000000e+00 : f32
    %60 = vector.broadcast %cst_37 : f32 to vector<8x256xf32>
    %61 = arith.addf %60, %59 : vector<8x256xf32>
    %62 = arith.divf %60, %61 : vector<8x256xf32>
    %63 = arith.mulf %57, %62 : vector<8x256xf32>
    %c3 = arith.constant 3 : index
    %c0_38 = arith.constant 0 : index
    %c0_39 = arith.constant 0 : index
    %64 = vector.load %arg8[%c3, %c0_38, %c0_39] : memref<4x256x256xf32, #tpu.memory_space<vmem>>, vector<1x256x256xf32>
    %65 = vector.shape_cast %64 : vector<1x256x256xf32> to vector<256x256xf32>
    %cst_40 = arith.constant dense<0.000000e+00> : vector<8x256xf32>
    %66 = tpu.matmul %63, %65, %cst_40 {dimension_numbers = #tpu.dot_dimension_numbers<[1], [0], [0], [1], [0, 0, 1, 1], [], []>} : vector<8x256xf32>, vector<256x256xf32>, vector<8x256xf32> -> vector<8x256xf32>
    %c3_41 = arith.constant 3 : index
    %c0_42 = arith.constant 0 : index
    %c0_43 = arith.constant 0 : index
    %67 = vector.load %arg9[%c3_41, %c0_42, %c0_43] : memref<4x1x256xf32, #tpu.memory_space<vmem>>, vector<1x1x256xf32>
    %68 = vector.shape_cast %67 : vector<1x1x256xf32> to vector<1x256xf32>
    %69 = vector.broadcast %68 : vector<1x256xf32> to vector<8x256xf32>
    %70 = arith.addf %66, %69 : vector<8x256xf32>
    %71 = arith.negf %70 : vector<8x256xf32>
    %72 = math.exp %71 : vector<8x256xf32>
    %cst_44 = arith.constant 1.000000e+00 : f32
    %73 = vector.broadcast %cst_44 : f32 to vector<8x256xf32>
    %74 = arith.addf %73, %72 : vector<8x256xf32>
    %75 = arith.divf %73, %74 : vector<8x256xf32>
    %76 = arith.mulf %70, %75 : vector<8x256xf32>
    %c0_45 = arith.constant 0 : index
    %c0_46 = arith.constant 0 : index
    %77 = vector.load %arg10[%c0_45, %c0_46] : memref<256x128xf32, #tpu.memory_space<vmem>>, vector<256x128xf32>
    %cst_47 = arith.constant dense<0.000000e+00> : vector<8x128xf32>
    %78 = tpu.matmul %76, %77, %cst_47 {dimension_numbers = #tpu.dot_dimension_numbers<[1], [0], [0], [1], [0, 0, 1, 1], [], []>} : vector<8x256xf32>, vector<256x128xf32>, vector<8x128xf32> -> vector<8x128xf32>
    %c0_48 = arith.constant 0 : index
    %c0_49 = arith.constant 0 : index
    %79 = vector.load %arg11[%c0_48, %c0_49] : memref<1x128xf32, #tpu.memory_space<vmem>>, vector<1x128xf32>
    %80 = vector.broadcast %79 : vector<1x128xf32> to vector<8x128xf32>
    %81 = arith.addf %78, %80 : vector<8x128xf32>
    %82 = math.tanh %81 : vector<8x128xf32>
    %c0_50 = arith.constant 0 : index
    %c0_51 = arith.constant 0 : index
    %83 = vector.load %arg12[%c0_50, %c0_51] : memref<8x128xf32, #tpu.memory_space<vmem>>, vector<8x128xf32>
    tpu.vector_store %arg12[%c0_50, %c0_51], %82 {strides = array<i32>} : memref<8x128xf32, #tpu.memory_space<vmem>>, vector<8x128xf32>,
    return
  }
  func.func @transform_0(%arg0: i32) -> (i32, i32) {
    %c0_i32 = arith.constant 0 : i32
    %c0_i32_0 = arith.constant 0 : i32
    return %arg0, %c0_i32 : i32, i32
  }
  func.func @transform_1(%arg0: i32) -> (i32, i32) {
    %c0_i32 = arith.constant 0 : i32
    %c0_i32_0 = arith.constant 0 : i32
    return %arg0, %c0_i32 : i32, i32
  }
  func.func @transform_2(%arg0: i32) -> (i32, i32) {
    %c0_i32 = arith.constant 0 : i32
    %c0_i32_0 = arith.constant 0 : i32
    %c0_i32_1 = arith.constant 0 : i32
    return %c0_i32, %c0_i32_0 : i32, i32
  }
  func.func @transform_3(%arg0: i32) -> (i32, i32) {
    %c0_i32 = arith.constant 0 : i32
    %c0_i32_0 = arith.constant 0 : i32
    %c0_i32_1 = arith.constant 0 : i32
    return %c0_i32, %c0_i32_0 : i32, i32
  }
  func.func @transform_4(%arg0: i32) -> (i32, i32) {
    %c0_i32 = arith.constant 0 : i32
    %c0_i32_0 = arith.constant 0 : i32
    %c0_i32_1 = arith.constant 0 : i32
    return %c0_i32, %c0_i32_0 : i32, i32
  }
  func.func @transform_5(%arg0: i32) -> (i32, i32) {
    %c0_i32 = arith.constant 0 : i32
    %c0_i32_0 = arith.constant 0 : i32
    %c0_i32_1 = arith.constant 0 : i32
    return %c0_i32, %c0_i32_0 : i32, i32
  }
  func.func @transform_6(%arg0: i32) -> (i32, i32) {
    %c0_i32 = arith.constant 0 : i32
    %c0_i32_0 = arith.constant 0 : i32
    %c0_i32_1 = arith.constant 0 : i32
    return %c0_i32, %c0_i32_0 : i32, i32
  }
  func.func @transform_7(%arg0: i32) -> (i32, i32, i32) {
    %c0_i32 = arith.constant 0 : i32
    %c0_i32_0 = arith.constant 0 : i32
    %c0_i32_1 = arith.constant 0 : i32
    %c0_i32_2 = arith.constant 0 : i32
    return %c0_i32, %c0_i32_0, %c0_i32_1 : i32, i32, i32
  }
  func.func @transform_8(%arg0: i32) -> (i32, i32, i32) {
    %c0_i32 = arith.constant 0 : i32
    %c0_i32_0 = arith.constant 0 : i32
    %c0_i32_1 = arith.constant 0 : i32
    %c0_i32_2 = arith.constant 0 : i32
    return %c0_i32, %c0_i32_0, %c0_i32_1 : i32, i32, i32
  }
  func.func @transform_9(%arg0: i32) -> (i32, i32) {
    %c0_i32 = arith.constant 0 : i32
    %c0_i32_0 = arith.constant 0 : i32
    %c0_i32_1 = arith.constant 0 : i32
    return %c0_i32, %c0_i32_0 : i32, i32
  }
  func.func @transform_10(%arg0: i32) -> (i32, i32) {
    %c0_i32 = arith.constant 0 : i32
    %c0_i32_0 = arith.constant 0 : i32
    %c0_i32_1 = arith.constant 0 : i32
    return %c0_i32, %c0_i32_0 : i32, i32
  }
  func.func @transform_11(%arg0: i32) -> (i32, i32) {
    %c0_i32 = arith.constant 0 : i32
    %c0_i32_0 = arith.constant 0 : i32
    return %arg0, %c0_i32 : i32, i32
  }
}

</mosaic_0001>

<llo_original>
// kernel: tpu_custom_call.1
$region0: #{tpu_custom_call.1}
  #allocation0 [shape = 'u32[]', space=smem, size = 0x4, offset = 0x4, fixed_abs, tag = 'smem constant byte address 0x4 - core index']
  #allocation1 [shape = 'u32[72,128]{1,0:T(1,128)}', space=vmem, size = 0x9000, scoped, tag = 'internal scratch']
  %s0 = inlined_call_operand.vmem [shape: f32[8,80], index: 0, kind: input, shape index: {}]
  %s1 = inlined_call_operand.vmem [shape: f32[8,1], index: 1, kind: input, shape index: {}]
  %s2 = inlined_call_operand.hbm [shape: f32[1,64], index: 2, kind: input, shape index: {}]
  %s3 = inlined_call_operand.hbm [shape: f32[80,256], index: 3, kind: input, shape index: {}]
  %s4 = inlined_call_operand.hbm [shape: f32[64,256], index: 4, kind: input, shape index: {}]
  %s5 = inlined_call_operand.hbm [shape: f32[64,256], index: 5, kind: input, shape index: {}]
  %s6 = inlined_call_operand.hbm [shape: f32[1,256], index: 6, kind: input, shape index: {}]
  %s7 = inlined_call_operand.hbm [shape: f32[4,256,256], index: 7, kind: input, shape index: {}]
  %s8 = inlined_call_operand.vmem [shape: f32[4,1,256], index: 8, kind: input, shape index: {}]
  %s9 = inlined_call_operand.hbm [shape: f32[256,128], index: 9, kind: input, shape index: {}]
  %s10 = inlined_call_operand.vmem [shape: f32[1,128], index: 10, kind: input, shape index: {}]
  %s11 = inlined_call_operand.hbm [shape: f32[8,128], index: 11, kind: output, shape index: {}]
  %s12 = sld [smem:[#allocation0]]
  $region82: #{tpu_custom_call.1} parent=0
    _
  %s14 = ssub.s32 1, %s12
  %s15 = scalar_select 0, %s14, %s12
  $region1: #{tpu_custom_call.1} parent=0
    #allocation2 [shape = 'u8[512]{0}', space=vmem, size = 0x400, scoped, tag = 'input window, operand 2, single buffered']
    #allocation3 [shape = 's32[1]{0}', space=sflag, size = 0x4, scoped, tag = 'scoped memory for tpu_custom_call.1']
    #allocation4 [shape = 's32[1]{0}', space=sflag, size = 0x4, scoped, tag = 'scoped memory for tpu_custom_call.1']
    #allocation5 [shape = 'u8[81920]{0}', space=vmem, size = 0x14000, scoped, tag = 'input window, operand 3, single buffered']
    #allocation6 [shape = 's32[1]{0}', space=sflag, size = 0x4, scoped, tag = 'scoped memory for tpu_custom_call.1']
    #allocation7 [shape = 'u8[65536]{0}', space=vmem, size = 0x10000, scoped, tag = 'input window, operand 4, single buffered']
    #allocation8 [shape = 'u8[65536]{0}', space=vmem, size = 0x10000, scoped, tag = 'input window, operand 5, single buffered']
    #allocation9 [shape = 's32[1]{0}', space=sflag, size = 0x4, scoped, tag = 'scoped memory for tpu_custom_call.1']
    #allocation10 [shape = 'u8[1024]{0}', space=vmem, size = 0x400, scoped, tag = 'input window, operand 6, single buffered']
    #allocation11 [shape = 'u8[1048576]{0}', space=vmem, size = 0x100000, scoped, tag = 'input window, operand 7, single buffered']
    #allocation12 [shape = 's32[1]{0}', space=sflag, size = 0x4, scoped, tag = 'scoped memory for tpu_custom_call.1']
    #allocation13 [shape = 'u8[131072]{0}', space=vmem, size = 0x20000, scoped, tag = 'input window, operand 9, single buffered']
    #allocation14 [shape = 'u8[4096]{0}', space=vmem, size = 0x1000, scoped, tag = 'output window, operand 0, single buffered']
    %16 = vsyncpa [#allocation3], 0
    %17 = vsyncpa [#allocation6], 0
    %18 = vsyncpa [#allocation9], 0
    %19 = vsyncpa [#allocation12], 0
    %20 = vsyncpa [#allocation4], 0
    // Predicated region
    $region2: #{tpu_custom_call.1} parent=1 // pred_check
      _
    $region3: #{tpu_custom_call.1} parent=1 // pred_check_branch
      %22 = sbr.rel (0) target = $region5
    $region4: #{tpu_custom_call.1} parent=1 // pred_region
      _
    $region5: #{tpu_custom_call.1} parent=1 // pred_fallthru
      _
    // Predicated region
    $region6: #{tpu_custom_call.1} parent=1 // pred_check
      _
    $region7: #{tpu_custom_call.1} parent=1 // pred_check_branch
      %24 = sbr.rel (0) target = $region9
    $region8: #{tpu_custom_call.1} parent=1 // pred_region
      _
    $region9: #{tpu_custom_call.1} parent=1 // pred_fallthru
      _
    // Predicated region
    $region10: #{tpu_custom_call.1} parent=1 // pred_check
      _
    $region11: #{tpu_custom_call.1} parent=1 // pred_check_branch
      %26 = sbr.rel (0) target = $region13
    $region12: #{tpu_custom_call.1} parent=1 // pred_region
      %28 = vsyncadd [#allocation3], 0
      %s30 = sshll.u32 %s2, 4
      %s31 = int_to_ptr.hbm [resolvable:$true] %s30
      %s32 = sshll.u32 [#allocation2], 4
      %s33 = int_to_ptr.vmem [resolvable:$true] %s32
      %35 = dma.hbm_to_vmem [thread:$0]  %s31, 16, %s33, [#allocation3]
    $region13: #{tpu_custom_call.1} parent=1 // pred_fallthru
      _
    // Predicated region
    $region14: #{tpu_custom_call.1} parent=1 // pred_check
      _
    $region15: #{tpu_custom_call.1} parent=1 // pred_check_branch
      %37 = sbr.rel (0) target = $region17
    $region16: #{tpu_custom_call.1} parent=1 // pred_region
      %39 = vsyncadd [#allocation6], 0
      %s40 = sshll.u32 %s3, 4
      %s41 = int_to_ptr.hbm [resolvable:$true] %s40
      %s42 = sshll.u32 [#allocation5], 4
      %s43 = int_to_ptr.vmem [resolvable:$true] %s42
      %48 = dma.hbm_to_vmem [thread:$0]  %s41, 2560, %s43, [#allocation6], 256, 256, 16
    $region17: #{tpu_custom_call.1} parent=1 // pred_fallthru
      _
    // Predicated region
    $region18: #{tpu_custom_call.1} parent=1 // pred_check
      _
    $region19: #{tpu_custom_call.1} parent=1 // pred_check_branch
      %50 = sbr.rel (0) target = $region21
    $region20: #{tpu_custom_call.1} parent=1 // pred_region
      %52 = vsyncadd [#allocation6], 0
      %s53 = sshll.u32 %s4, 4
      %s54 = int_to_ptr.hbm [resolvable:$true] %s53
      %s55 = sshll.u32 [#allocation7], 4
      %s56 = int_to_ptr.vmem [resolvable:$true] %s55
      %61 = dma.hbm_to_vmem [thread:$0]  %s54, 2048, %s56, [#allocation6], 256, 256, 16
    $region21: #{tpu_custom_call.1} parent=1 // pred_fallthru
      _
    // Predicated region
    $region22: #{tpu_custom_call.1} parent=1 // pred_check
      _
    $region23: #{tpu_custom_call.1} parent=1 // pred_check_branch
      %63 = sbr.rel (0) target = $region25
    $region24: #{tpu_custom_call.1} parent=1 // pred_region
      %65 = vsyncadd [#allocation9], 0
      %s66 = sshll.u32 %s5, 4
      %s67 = int_to_ptr.hbm [resolvable:$true] %s66
      %s68 = sshll.u32 [#allocation8], 4
      %s69 = int_to_ptr.vmem [resolvable:$true] %s68
      %74 = dma.hbm_to_vmem [thread:$0]  %s67, 2048, %s69, [#allocation9], 256, 256, 16
    $region25: #{tpu_custom_call.1} parent=1 // pred_fallthru
      _
    // Predicated region
    $region26: #{tpu_custom_call.1} parent=1 // pred_check
      _
    $region27: #{tpu_custom_call.1} parent=1 // pred_check_branch
      %76 = sbr.rel (0) target = $region29
    $region28: #{tpu_custom_call.1} parent=1 // pred_region
      %78 = vsyncadd [#allocation9], 0
      %s80 = sshll.u32 %s6, 4
      %s81 = int_to_ptr.hbm [resolvable:$true] %s80
      %s82 = sshll.u32 [#allocation10], 4
      %s83 = int_to_ptr.vmem [resolvable:$true] %s82
      %85 = dma.hbm_to_vmem [thread:$0]  %s81, 32, %s83, [#allocation9]
    $region29: #{tpu_custom_call.1} parent=1 // pred_fallthru
      _
    // Predicated region
    $region30: #{tpu_custom_call.1} parent=1 // pred_check
      _
    $region31: #{tpu_custom_call.1} parent=1 // pred_check_branch
      %87 = sbr.rel (0) target = $region33
    $region32: #{tpu_custom_call.1} parent=1 // pred_region
      %89 = vsyncadd [#allocation12], 0
      %s90 = sshll.u32 %s7, 4
      %s91 = int_to_ptr.hbm [resolvable:$true] %s90
      %s92 = sshll.u32 [#allocation11], 4
      %s93 = int_to_ptr.vmem [resolvable:$true] %s92
      %98 = dma.hbm_to_vmem [thread:$0]  %s91, 32768, %s93, [#allocation12], 256, 256, 16
    $region33: #{tpu_custom_call.1} parent=1 // pred_fallthru
      _
    // Predicated region
    $region34: #{tpu_custom_call.1} parent=1 // pred_check
      _
    $region35: #{tpu_custom_call.1} parent=1 // pred_check_branch
      %100 = sbr.rel (0) target = $region37
    $region36: #{tpu_custom_call.1} parent=1 // pred_region
      _
    $region37: #{tpu_custom_call.1} parent=1 // pred_fallthru
      _
    // Predicated region
    $region38: #{tpu_custom_call.1} parent=1 // pred_check
      _
    $region39: #{tpu_custom_call.1} parent=1 // pred_check_branch
      %102 = sbr.rel (0) target = $region41
    $region40: #{tpu_custom_call.1} parent=1 // pred_region
      %104 = vsyncadd [#allocation12], 0
      %s105 = sshll.u32 %s9, 4
      %s106 = int_to_ptr.hbm [resolvable:$true] %s105
      %s107 = sshll.u32 [#allocation13], 4
      %s108 = int_to_ptr.vmem [resolvable:$true] %s107
      %113 = dma.hbm_to_vmem [thread:$0]  %s106, 4096, %s108, [#allocation12], 128, 128, 8
    $region41: #{tpu_custom_call.1} parent=1 // pred_fallthru
      _
    // Predicated region
    $region42: #{tpu_custom_call.1} parent=1 // pred_check
      _
    $region43: #{tpu_custom_call.1} parent=1 // pred_check_branch
      %115 = sbr.rel (0) target = $region45
    $region44: #{tpu_custom_call.1} parent=1 // pred_region
      _
    $region45: #{tpu_custom_call.1} parent=1 // pred_fallthru
      _
    // Predicated region
    $region46: #{tpu_custom_call.1} parent=1 // pred_check
      _
    $region47: #{tpu_custom_call.1} parent=1 // pred_check_branch
      %117 = sbr.rel (0) target = $region49
    $region48: #{tpu_custom_call.1} parent=1 // pred_region
      %119 = dma.done [#allocation3], 16
    $region49: #{tpu_custom_call.1} parent=1 // pred_fallthru
      _
    // Predicated region
    $region50: #{tpu_custom_call.1} parent=1 // pred_check
      _
    $region51: #{tpu_custom_call.1} parent=1 // pred_check_branch
      %121 = sbr.rel (0) target = $region53
    $region52: #{tpu_custom_call.1} parent=1 // pred_region
      %123 = dma.done [#allocation6], 2560
    $region53: #{tpu_custom_call.1} parent=1 // pred_fallthru
      _
    // Predicated region
    $region54: #{tpu_custom_call.1} parent=1 // pred_check
      _
    $region55: #{tpu_custom_call.1} parent=1 // pred_check_branch
      %125 = sbr.rel (0) target = $region57
    $region56: #{tpu_custom_call.1} parent=1 // pred_region
      %127 = dma.done [#allocation6], 2048
    $region57: #{tpu_custom_call.1} parent=1 // pred_fallthru
      _
    // Predicated region
    $region58: #{tpu_custom_call.1} parent=1 // pred_check
      _
    $region59: #{tpu_custom_call.1} parent=1 // pred_check_branch
      %129 = sbr.rel (0) target = $region61
    $region60: #{tpu_custom_call.1} parent=1 // pred_region
      %131 = dma.done [#allocation9], 2048
    $region61: #{tpu_custom_call.1} parent=1 // pred_fallthru
      _
    // Predicated region
    $region62: #{tpu_custom_call.1} parent=1 // pred_check
      _
    $region63: #{tpu_custom_call.1} parent=1 // pred_check_branch
      %133 = sbr.rel (0) target = $region65
    $region64: #{tpu_custom_call.1} parent=1 // pred_region
      %135 = dma.done [#allocation9], 32
    $region65: #{tpu_custom_call.1} parent=1 // pred_fallthru
      _
    // Predicated region
    $region66: #{tpu_custom_call.1} parent=1 // pred_check
      _
    $region67: #{tpu_custom_call.1} parent=1 // pred_check_branch
      %137 = sbr.rel (0) target = $region69
    $region68: #{tpu_custom_call.1} parent=1 // pred_region
      %139 = dma.done [#allocation12], 32768
    $region69: #{tpu_custom_call.1} parent=1 // pred_fallthru
      _
    // Predicated region
    $region70: #{tpu_custom_call.1} parent=1 // pred_check
      _
    $region71: #{tpu_custom_call.1} parent=1 // pred_check_branch
      %141 = sbr.rel (0) target = $region73
    $region72: #{tpu_custom_call.1} parent=1 // pred_region
      %143 = dma.done [#allocation12], 4096
    $region73: #{tpu_custom_call.1} parent=1 // pred_fallthru
      _
    %v144 = vld [vmem:[%s1] sm:$0xff]
    %v145 = vld [vmem:[#allocation2] sm:$0x1]
    %147 = vset.pattern.permute.xlu0 0
    %148 = vperm.xlu0 %147, %v144
    %v149 = vpop.permute.xlu0 %148
    %v152 = vperm.slane %v145, 0
    %v154 = vmul.f32 %v149, %v152
    %v155 = vand.u32 2147483647, %v154
    %vm156 = vcmp.le.f32.partialorder %v155, 0.7853982
    %vm157 = vcmp.lt.s32.totalorder %v154, 0
    %v158 = vand.u32 %v154, 2139095040
    %v159 = vshrl.u32 %v158, 23
    %v160 = vsub.s32 %v159, 127
    %v161 = vand.u32 2147483647, %v154
    %v162 = vand.u32 %v161, 8388607
    %v163 = vor.u32 %v162, 8388608
    %v164 = vsub.s32 0, %v163
    %v165 = vadd.s32 %v160, 1
    %vm166 = vcmp.gt.s32.totalorder %v165, 0
    %v167 = vsel %vm166, %v165, 0
    %v168 = vshrl.u32 %v167, 5
    %v169 = vand.u32 %v167, 31
    %v170 = vsub.s32 32, %v169
    %v171 = vshrl.u32 683565275, %v170
    %v172 = vshll.u32 683565275, %v169
    %v173 = vshrl.u32 2475754826, %v170
    %v174 = vor.u32 %v172, %v173
    %v175 = vshll.u32 2475754826, %v169
    %v176 = vshrl.u32 2131351028, %v170
    %v177 = vor.u32 %v175, %v176
    %v178 = vshll.u32 2131351028, %v169
    %v179 = vshrl.u32 2102212464, %v170
    %v180 = vor.u32 %v178, %v179
    %v181 = vshll.u32 2102212464, %v169
    %v182 = vshrl.u32 920167782, %v170
    %v183 = vor.u32 %v181, %v182
    %v184 = vshll.u32 920167782, %v169
    %v185 = vshrl.u32 1326507024, %v170
    %v186 = vor.u32 %v184, %v185
    %vm187 = vcmp.lt.s32.totalorder %v168, 1
    %vm188 = vcmp.lt.s32.totalorder %v168, 2
    %vm189 = vcmp.lt.s32.totalorder %v168, 3
    %vm190 = vcmp.lt.s32.totalorder %v168, 4
    %v191 = vsel %vm187, %v171, %v174
    %v192 = vsel %vm190, %v180, 2102212464
    %v193 = vsel %vm189, %v177, %v192
    %v194 = vsel %vm188, %v191, %v193
    %v195 = vsel %vm187, %v174, %v177
    %v196 = vsel %vm190, %v183, 920167782
    %v197 = vsel %vm189, %v180, %v196
    %v198 = vsel %vm188, %v195, %v197
    %v199 = vsel %vm187, %v177, %v180
    %v200 = vsel %vm190, %v186, 1326507024
    %v201 = vsel %vm189, %v183, %v200
    %v202 = vsel %vm188, %v199, %v201
    %v203 = vshll.u32 %v163, 8
    %v204 = vand.u32 %v203, 65535
    %v205 = vshrl.u32 %v203, 16
    %v206 = vand.u32 %v202, 65535
    %v207 = vshrl.u32 %v202, 16
    %v208 = vmul.u32 %v204, %v206
    %v209 = vmul.u32 %v204, %v207
    %v210 = vmul.u32 %v205, %v206
    %v211 = vmul.u32 %v205, %v207
    %v212 = vshll.u32 %v209, 16
    %v213 = vshrl.u32 %v209, 16
    %v214 = vshll.u32 %v210, 16
    %v215 = vshrl.u32 %v210, 16
    %vm216 = vc.u32 %v208, %v212
    %v217 = vsel %vm216, 1, 0
    %v218 = vadd.s32 %v208, %v212
    %v219 = vadd.s32 %v211, %v217
    %vm220 = vc.u32 %v218, %v214
    %v221 = vsel %vm220, 1, 0
    %v222 = vadd.s32 %v218, %v214
    %v223 = vadd.s32 %v219, %v221
    %v224 = vadd.s32 %v223, %v213
    %v225 = vadd.s32 %v224, %v215
    %v226 = vand.u32 %v203, 65535
    %v227 = vshrl.u32 %v203, 16
    %v228 = vand.u32 %v198, 65535
    %v229 = vshrl.u32 %v198, 16
    %v230 = vmul.u32 %v226, %v228
    %v231 = vmul.u32 %v226, %v229
    %v232 = vmul.u32 %v227, %v228
    %v233 = vmul.u32 %v227, %v229
    %v234 = vshll.u32 %v231, 16
    %v235 = vshrl.u32 %v231, 16
    %v236 = vshll.u32 %v232, 16
    %v237 = vshrl.u32 %v232, 16
    %vm238 = vc.u32 %v230, %v234
    %v239 = vsel %vm238, 1, 0
    %v240 = vadd.s32 %v230, %v234
    %v241 = vadd.s32 %v233, %v239
    %vm242 = vc.u32 %v240, %v236
    %v243 = vsel %vm242, 1, 0
    %v244 = vadd.s32 %v240, %v236
    %v245 = vadd.s32 %v241, %v243
    %v246 = vadd.s32 %v245, %v235
    %v247 = vadd.s32 %v246, %v237
    %v248 = vmul.u32 %v203, %v194
    %v249 = vadd.s32 %v225, %v244
    %vm250 = vc.u32 %v225, %v244
    %v251 = vadd.s32 %v247, 1
    %v252 = vsel %vm250, %v251, %v247
    %v253 = vadd.s32 %v248, %v252
    %v254 = vadd.s32 %v253, 536870912
    %v255 = vshrl.u32 %v254, 30
    %v256 = vshll.u32 %v255, 30
    %v257 = vsub.s32 %v253, %v256
    %vm258 = vcmp.lt.s32.totalorder %v257, 0
    %v259 = vsub.s32 0, %v257
    %v260 = vsel %vm258, %v259, %v257
    %v261 = vclz %v260
    %v262 = vsub.s32 %v261, 2
    %vm263 = vcmp.gt.s32.totalorder 0, %v262
    %v264 = vsel %vm263, 0, %v262
    %v265 = vsub.s32 32, %v264
    %v266 = vshll.u32 %v257, %v264
    %v267 = vshrl.u32 %v249, %v265
    %v268 = vor.u32 %v266, %v267
    %v269 = vsub.s32 4294967266, %v264
    %v270 = vadd.s32 %v269, 127
    %v271 = vshll.u32 %v270, 23
    %v272 = vor.u32 4788187, %v271
    %v273 = vand.u32 2147483647, %v272
    %v275 = vcvt.s32.f32 %v268
    %v276 = vmul.f32 %v275, %v273
    %v277 = vxor.u32 %v276, 2147483648
    %v278 = vsel %vm157, %v277, %v276
    %v279 = vsub.s32 4, %v255
    %v280 = vsel %vm157, %v279, %v255
    %v281 = vsel %vm156, %v154, %v278
    %v282 = vsel %vm156, 0, %v280
    %v283 = vmul.f32 %v281, %v281
    %v284 = vmul.f32 %v283, -0.001358992
    %v285 = vadd.f32 %v284, 0.041655596
    %v286 = vmul.f32 %v283, %v285
    %v287 = vadd.f32 %v286, -0.4999988
    %v288 = vmul.f32 %v283, %v287
    %v289 = vadd.f32 1.0, %v288
    %v290 = vmul.f32 %v281, %v281
    %v291 = vmul.f32 %v290, -0.00019511016
    %v292 = vadd.f32 %v291, 0.008332121
    %v293 = vmul.f32 %v290, %v292
    %v294 = vadd.f32 %v293, -0.16666654
    %v295 = vmul.f32 %v290, %v294
    %v296 = vadd.f32 %v295, 1.0
    %v297 = vmul.f32 %v296, %v281
    %vm298 = vweird.f32 %v154
    %v299 = vand.u32 %v282, 3
    %vm300 = vcmp.lt.s32.totalorder %v299, 2
    %vm301 = vcmp.eq.s32.totalorder %v299, 0
    %v302 = vxor.u32 %v297, 2147483648
    %v303 = vsel %vm301, %v289, %v302
    %vm304 = vcmp.eq.s32.totalorder %v299, 2
    %v305 = vxor.u32 %v289, 2147483648
    %v306 = vsel %vm304, %v305, %v297
    %v307 = vsel %vm300, %v303, %v306
    %v308 = vsel %vm298, nan, %v307
    %v309 = vand.u32 2147483647, %v154
    %vm310 = vcmp.le.f32.partialorder %v309, 0.7853982
    %vm311 = vcmp.lt.s32.totalorder %v154, 0
    %v312 = vand.u32 %v154, 2139095040
    %v313 = vshrl.u32 %v312, 23
    %v314 = vsub.s32 %v313, 127
    %v315 = vand.u32 2147483647, %v154
    %v316 = vand.u32 %v315, 8388607
    %v317 = vor.u32 %v316, 8388608
    %v318 = vsub.s32 0, %v317
    %v319 = vadd.s32 %v314, 1
    %vm320 = vcmp.gt.s32.totalorder %v319, 0
    %v321 = vsel %vm320, %v319, 0
    %v322 = vshrl.u32 %v321, 5
    %v323 = vand.u32 %v321, 31
    %v324 = vsub.s32 32, %v323
    %v325 = vshrl.u32 683565275, %v324
    %v326 = vshll.u32 683565275, %v323
    %v327 = vshrl.u32 2475754826, %v324
    %v328 = vor.u32 %v326, %v327
    %v329 = vshll.u32 2475754826, %v323
    %v330 = vshrl.u32 2131351028, %v324
    %v331 = vor.u32 %v329, %v330
    %v332 = vshll.u32 2131351028, %v323
    %v333 = vshrl.u32 2102212464, %v324
    %v334 = vor.u32 %v332, %v333
    %v335 = vshll.u32 2102212464, %v323
    %v336 = vshrl.u32 920167782, %v324
    %v337 = vor.u32 %v335, %v336
    %v338 = vshll.u32 920167782, %v323
    %v339 = vshrl.u32 1326507024, %v324
    %v340 = vor.u32 %v338, %v339
    %vm341 = vcmp.lt.s32.totalorder %v322, 1
    %vm342 = vcmp.lt.s32.totalorder %v322, 2
    %vm343 = vcmp.lt.s32.totalorder %v322, 3
    %vm344 = vcmp.lt.s32.totalorder %v322, 4
    %v345 = vsel %vm341, %v325, %v328
    %v346 = vsel %vm344, %v334, 2102212464
    %v347 = vsel %vm343, %v331, %v346
    %v348 = vsel %vm342, %v345, %v347
    %v349 = vsel %vm341, %v328, %v331
    %v350 = vsel %vm344, %v337, 920167782
    %v351 = vsel %vm343, %v334, %v350
    %v352 = vsel %vm342, %v349, %v351
    %v353 = vsel %vm341, %v331, %v334
    %v354 = vsel %vm344, %v340, 1326507024
    %v355 = vsel %vm343, %v337, %v354
    %v356 = vsel %vm342, %v353, %v355
    %v357 = vshll.u32 %v317, 8
    %v358 = vand.u32 %v357, 65535
    %v359 = vshrl.u32 %v357, 16
    %v360 = vand.u32 %v356, 65535
    %v361 = vshrl.u32 %v356, 16
    %v362 = vmul.u32 %v358, %v360
    %v363 = vmul.u32 %v358, %v361
    %v364 = vmul.u32 %v359, %v360
    %v365 = vmul.u32 %v359, %v361
    %v366 = vshll.u32 %v363, 16
    %v367 = vshrl.u32 %v363, 16
    %v368 = vshll.u32 %v364, 16
    %v369 = vshrl.u32 %v364, 16
    %vm370 = vc.u32 %v362, %v366
    %v371 = vsel %vm370, 1, 0
    %v372 = vadd.s32 %v362, %v366
    %v373 = vadd.s32 %v365, %v371
    %vm374 = vc.u32 %v372, %v368
    %v375 = vsel %vm374, 1, 0
    %v376 = vadd.s32 %v372, %v368
    %v377 = vadd.s32 %v373, %v375
    %v378 = vadd.s32 %v377, %v367
    %v379 = vadd.s32 %v378, %v369
    %v380 = vand.u32 %v357, 65535
    %v381 = vshrl.u32 %v357, 16
    %v382 = vand.u32 %v352, 65535
    %v383 = vshrl.u32 %v352, 16
    %v384 = vmul.u32 %v380, %v382
    %v385 = vmul.u32 %v380, %v383
    %v386 = vmul.u32 %v381, %v382
    %v387 = vmul.u32 %v381, %v383
    %v388 = vshll.u32 %v385, 16
    %v389 = vshrl.u32 %v385, 16
    %v390 = vshll.u32 %v386, 16
    %v391 = vshrl.u32 %v386, 16
    %vm392 = vc.u32 %v384, %v388
    %v393 = vsel %vm392, 1, 0
    %v394 = vadd.s32 %v384, %v388
    %v395 = vadd.s32 %v387, %v393
    %vm396 = vc.u32 %v394, %v390
    %v397 = vsel %vm396, 1, 0
    %v398 = vadd.s32 %v394, %v390
    %v399 = vadd.s32 %v395, %v397
    %v400 = vadd.s32 %v399, %v389
    %v401 = vadd.s32 %v400, %v391
    %v402 = vmul.u32 %v357, %v348
    %v403 = vadd.s32 %v379, %v398
    %vm404 = vc.u32 %v379, %v398
    %v405 = vadd.s32 %v401, 1
    %v406 = vsel %vm404, %v405, %v401
    %v407 = vadd.s32 %v402, %v406
    %v408 = vadd.s32 %v407, 536870912
    %v409 = vshrl.u32 %v408, 30
    %v410 = vshll.u32 %v409, 30
    %v411 = vsub.s32 %v407, %v410
    %vm412 = vcmp.lt.s32.totalorder %v411, 0
    %v413 = vsub.s32 0, %v411
    %v414 = vsel %vm412, %v413, %v411
    %v415 = vclz %v414
    %v416 = vsub.s32 %v415, 2
    %vm417 = vcmp.gt.s32.totalorder 0, %v416
    %v418 = vsel %vm417, 0, %v416
    %v419 = vsub.s32 32, %v418
    %v420 = vshll.u32 %v411, %v418
    %v421 = vshrl.u32 %v403, %v419
    %v422 = vor.u32 %v420, %v421
    %v423 = vsub.s32 4294967266, %v418
    %v424 = vadd.s32 %v423, 127
    %v425 = vshll.u32 %v424, 23
    %v426 = vor.u32 4788187, %v425
    %v427 = vand.u32 2147483647, %v426
    %v429 = vcvt.s32.f32 %v422
    %v430 = vmul.f32 %v429, %v427
    %v431 = vxor.u32 %v430, 2147483648
    %v432 = vsel %vm311, %v431, %v430
    %v433 = vsub.s32 4, %v409
    %v434 = vsel %vm311, %v433, %v409
    %v435 = vsel %vm310, %v154, %v432
    %v436 = vsel %vm310, 0, %v434
    %v437 = vmul.f32 %v435, %v435
    %v438 = vmul.f32 %v437, -0.001358992
    %v439 = vadd.f32 %v438, 0.041655596
    %v440 = vmul.f32 %v437, %v439
    %v441 = vadd.f32 %v440, -0.4999988
    %v442 = vmul.f32 %v437, %v441
    %v443 = vadd.f32 1.0, %v442
    %v444 = vmul.f32 %v435, %v435
    %v445 = vmul.f32 %v444, -0.00019511016
    %v446 = vadd.f32 %v445, 0.008332121
    %v447 = vmul.f32 %v444, %v446
    %v448 = vadd.f32 %v447, -0.16666654
    %v449 = vmul.f32 %v444, %v448
    %v450 = vadd.f32 %v449, 1.0
    %v451 = vmul.f32 %v450, %v435
    %vm452 = vweird.f32 %v154
    %v453 = vadd.s32 %v436, 3
    %v454 = vand.u32 %v453, 3
    %vm455 = vcmp.lt.s32.totalorder %v454, 2
    %vm456 = vcmp.eq.s32.totalorder %v454, 0
    %v457 = vxor.u32 %v451, 2147483648
    %v458 = vsel %vm456, %v443, %v457
    %vm459 = vcmp.eq.s32.totalorder %v454, 2
    %v460 = vxor.u32 %v443, 2147483648
    %v461 = vsel %vm459, %v460, %v451
    %v462 = vsel %vm455, %v458, %v461
    %v463 = vsel %vm452, nan, %v462
    %v464 = vld [vmem:[%s0] sm:$0xff]
    %v465 = vld [vmem:[#allocation5] sm:$0xff]
    %v466 = vld [vmem:[#allocation5 + $0x8] sm:$0xff]
    %v467 = vld [vmem:[#allocation5 + $0x10] sm:$0xff]
    %v468 = vld [vmem:[#allocation5 + $0x18] sm:$0xff]
    %v469 = vld [vmem:[#allocation5 + $0x20] sm:$0xff]
    %v470 = vld [vmem:[#allocation5 + $0x28] sm:$0xff]
    %v471 = vld [vmem:[#allocation5 + $0x30] sm:$0xff]
    %v472 = vld [vmem:[#allocation5 + $0x38] sm:$0xff]
    %v473 = vld [vmem:[#allocation5 + $0x40] sm:$0xff]
    %v474 = vld [vmem:[#allocation5 + $0x48] sm:$0xff]
    %v475 = vld [vmem:[#allocation5 + $0x50] sm:$0xff]
    %v476 = vld [vmem:[#allocation5 + $0x58] sm:$0xff]
    %v477 = vld [vmem:[#allocation5 + $0x60] sm:$0xff]
    %v478 = vld [vmem:[#allocation5 + $0x68] sm:$0xff]
    %v479 = vld [vmem:[#allocation5 + $0x70] sm:$0xff]
    %v480 = vld [vmem:[#allocation5 + $0x78] sm:$0xff]
    %v481 = vld [vmem:[#allocation5 + $0x80] sm:$0xff]
    %v482 = vld [vmem:[#allocation5 + $0x88] sm:$0xff]
    %v483 = vld [vmem:[#allocation5 + $0x90] sm:$0xff]
    %v484 = vld [vmem:[#allocation5 + $0x98] sm:$0xff]
    %v485 = vld [vmem:[#allocation7] sm:$0xff]
    %v486 = vld [vmem:[#allocation7 + $0x8] sm:$0xff]
    %v487 = vld [vmem:[#allocation7 + $0x10] sm:$0xff]
    %v488 = vld [vmem:[#allocation7 + $0x18] sm:$0xff]
    %v489 = vld [vmem:[#allocation7 + $0x20] sm:$0xff]
    %v490 = vld [vmem:[#allocation7 + $0x28] sm:$0xff]
    %v491 = vld [vmem:[#allocation7 + $0x30] sm:$0xff]
    %v492 = vld [vmem:[#allocation7 + $0x38] sm:$0xff]
    %v493 = vld [vmem:[#allocation7 + $0x40] sm:$0xff]
    %v494 = vld [vmem:[#allocation7 + $0x48] sm:$0xff]
    %v495 = vld [vmem:[#allocation7 + $0x50] sm:$0xff]
    %v496 = vld [vmem:[#allocation7 + $0x58] sm:$0xff]
    %v497 = vld [vmem:[#allocation7 + $0x60] sm:$0xff]
    %v498 = vld [vmem:[#allocation7 + $0x68] sm:$0xff]
    %v499 = vld [vmem:[#allocation7 + $0x70] sm:$0xff]
    %v500 = vld [vmem:[#allocation7 + $0x78] sm:$0xff]
    %vm501 = vcmask 523264
    %v503 = vsel %vm501, %v308, 0
    %505 = vmatpush.msra.mxu0 0.0
    %506 = vmatpush.msra.mxu0 0.0
    %507 = vmatpush.msra.mxu0 0.0
    %508 = vmatpush.msra.mxu0 0.0
    %509 = vmatpush.msra.mxu0 0.0
    %510 = vmatpush.msra.mxu0 0.0
    %511 = vmatpush.msra.mxu0 0.0
    %512 = vmatpush.msra.mxu0 0.0
    %513 = vmatpush.msra.mxu0 %v499
    %514 = vmatpush.msra.mxu0 %v497
    %515 = vmatpush.msra.mxu0 %v495
    %516 = vmatpush.msra.mxu0 %v493
    %517 = vmatpush.msra.mxu0 %v491
    %518 = vmatpush.msra.mxu0 %v489
    %519 = vmatpush.msra.mxu0 %v487
    %520 = vmatpush.msra.mxu0 %v485
    %521 = vmatmul.f32.gmra.mxu0 %v503
    %v522 = vpop.f32.mrf.mxu0
    %v523 = vadd.f32 0.0, %v522
    %524 = vdwg.mxu0
    %525 = vmatpush.msra.mxu0 0.0
    %526 = vmatpush.msra.mxu0 0.0
    %527 = vmatpush.msra.mxu0 0.0
    %528 = vmatpush.msra.mxu0 0.0
    %529 = vmatpush.msra.mxu0 0.0
    %530 = vmatpush.msra.mxu0 0.0
    %531 = vmatpush.msra.mxu0 0.0
    %532 = vmatpush.msra.mxu0 0.0
    %533 = vmatpush.msra.mxu0 %v500
    %534 = vmatpush.msra.mxu0 %v498
    %535 = vmatpush.msra.mxu0 %v496
    %536 = vmatpush.msra.mxu0 %v494
    %537 = vmatpush.msra.mxu0 %v492
    %538 = vmatpush.msra.mxu0 %v490
    %539 = vmatpush.msra.mxu0 %v488
    %540 = vmatpush.msra.mxu0 %v486
    %541 = vmatmul.f32.gmra.mxu0 %v503
    %v542 = vpop.f32.mrf.mxu0
    %v543 = vadd.f32 0.0, %v542
    %544 = vdwg.mxu0
    %vm545 = vcmask 654336
    %v547 = vsel %vm545, %v464, 0
    %549 = vmatpush.msra.mxu0 0.0
    %550 = vmatpush.msra.mxu0 0.0
    %551 = vmatpush.msra.mxu0 0.0
    %552 = vmatpush.msra.mxu0 0.0
    %553 = vmatpush.msra.mxu0 0.0
    %554 = vmatpush.msra.mxu0 0.0
    %555 = vmatpush.msra.mxu0 %v483
    %556 = vmatpush.msra.mxu0 %v481
    %557 = vmatpush.msra.mxu0 %v479
    %558 = vmatpush.msra.mxu0 %v477
    %559 = vmatpush.msra.mxu0 %v475
    %560 = vmatpush.msra.mxu0 %v473
    %561 = vmatpush.msra.mxu0 %v471
    %562 = vmatpush.msra.mxu0 %v469
    %563 = vmatpush.msra.mxu0 %v467
    %564 = vmatpush.msra.mxu0 %v465
    %565 = vmatmul.f32.gmra.mxu0 %v547
    %v566 = vpop.f32.mrf.mxu0
    %v567 = vadd.f32 %v523, %v566
    %568 = vdwg.mxu0
    %569 = vmatpush.msra.mxu0 0.0
    %570 = vmatpush.msra.mxu0 0.0
    %571 = vmatpush.msra.mxu0 0.0
    %572 = vmatpush.msra.mxu0 0.0
    %573 = vmatpush.msra.mxu0 0.0
    %574 = vmatpush.msra.mxu0 0.0
    %575 = vmatpush.msra.mxu0 %v484
    %576 = vmatpush.msra.mxu0 %v482
    %577 = vmatpush.msra.mxu0 %v480
    %578 = vmatpush.msra.mxu0 %v478
    %579 = vmatpush.msra.mxu0 %v476
    %580 = vmatpush.msra.mxu0 %v474
    %581 = vmatpush.msra.mxu0 %v472
    %582 = vmatpush.msra.mxu0 %v470
    %583 = vmatpush.msra.mxu0 %v468
    %584 = vmatpush.msra.mxu0 %v466
    %585 = vmatmul.f32.gmra.mxu0 %v547
    %v586 = vpop.f32.mrf.mxu0
    %v587 = vadd.f32 %v543, %v586
    %588 = vdwg.mxu0
    %v589 = vld [vmem:[#allocation8] sm:$0xff]
    %v590 = vld [vmem:[#allocation8 + $0x8] sm:$0xff]
    %v591 = vld [vmem:[#allocation8 + $0x10] sm:$0xff]
    %v592 = vld [vmem:[#allocation8 + $0x18] sm:$0xff]
    %v593 = vld [vmem:[#allocation8 + $0x20] sm:$0xff]
    %v594 = vld [vmem:[#allocation8 + $0x28] sm:$0xff]
    %v595 = vld [vmem:[#allocation8 + $0x30] sm:$0xff]
    %v596 = vld [vmem:[#allocation8 + $0x38] sm:$0xff]
    %v597 = vld [vmem:[#allocation8 + $0x40] sm:$0xff]
    %v598 = vld [vmem:[#allocation8 + $0x48] sm:$0xff]
    %v599 = vld [vmem:[#allocation8 + $0x50] sm:$0xff]
    %v600 = vld [vmem:[#allocation8 + $0x58] sm:$0xff]
    %v601 = vld [vmem:[#allocation8 + $0x60] sm:$0xff]
    %v602 = vld [vmem:[#allocation8 + $0x68] sm:$0xff]
    %v603 = vld [vmem:[#allocation8 + $0x70] sm:$0xff]
    %v604 = vld [vmem:[#allocation8 + $0x78] sm:$0xff]
    %v606 = vsel %vm501, %v463, 0
    %608 = vmatpush.msra.mxu0 0.0
    %609 = vmatpush.msra.mxu0 0.0
    %610 = vmatpush.msra.mxu0 0.0
    %611 = vmatpush.msra.mxu0 0.0
    %612 = vmatpush.msra.mxu0 0.0
    %613 = vmatpush.msra.mxu0 0.0
    %614 = vmatpush.msra.mxu0 0.0
    %615 = vmatpush.msra.mxu0 0.0
    %616 = vmatpush.msra.mxu0 %v603
    %617 = vmatpush.msra.mxu0 %v601
    %618 = vmatpush.msra.mxu0 %v599
    %619 = vmatpush.msra.mxu0 %v597
    %620 = vmatpush.msra.mxu0 %v595
    %621 = vmatpush.msra.mxu0 %v593
    %622 = vmatpush.msra.mxu0 %v591
    %623 = vmatpush.msra.mxu0 %v589
    %624 = vmatmul.f32.gmra.mxu0 %v606
    %v625 = vpop.f32.mrf.mxu0
    %v626 = vadd.f32 0.0, %v625
    %627 = vdwg.mxu0
    %628 = vmatpush.msra.mxu0 0.0
    %629 = vmatpush.msra.mxu0 0.0
    %630 = vmatpush.msra.mxu0 0.0
    %631 = vmatpush.msra.mxu0 0.0
    %632 = vmatpush.msra.mxu0 0.0
    %633 = vmatpush.msra.mxu0 0.0
    %634 = vmatpush.msra.mxu0 0.0
    %635 = vmatpush.msra.mxu0 0.0
    %636 = vmatpush.msra.mxu0 %v604
    %637 = vmatpush.msra.mxu0 %v602
    %638 = vmatpush.msra.mxu0 %v600
    %639 = vmatpush.msra.mxu0 %v598
    %640 = vmatpush.msra.mxu0 %v596
    %641 = vmatpush.msra.mxu0 %v594
    %642 = vmatpush.msra.mxu0 %v592
    %643 = vmatpush.msra.mxu0 %v590
    %644 = vmatmul.f32.gmra.mxu0 %v606
    %v645 = vpop.f32.mrf.mxu0
    %v646 = vadd.f32 0.0, %v645
    %647 = vdwg.mxu0
    %v648 = vadd.f32 %v567, %v626
    %v649 = vadd.f32 %v587, %v646
    %v650 = vld [vmem:[#allocation10] sm:$0x3]
    %v652 = vperm.slane %v650, 0
    %v653 = vperm.slane %v650, 1
    %v656 = vadd.f32 %v648, %v652
    %v657 = vadd.f32 %v649, %v653
    %v658 = vxor.u32 %v656, 2147483648
    %v659 = vxor.u32 %v657, 2147483648
    %v660 = vmul.f32 %v658, 1.442695
    %v661 = vpow.pop %v660
    %v662 = vmul.f32 %v659, 1.442695
    %v663 = vpow.pop %v662
    %v664 = vadd.f32 %v661, 1.0
    %v665 = vadd.f32 %v663, 1.0
    %v666 = vrcp.pop %v664
    %v667 = vmul.f32 %v664, %v666
    %v668 = vsub.f32 1.0, %v667
    %v669 = vmul.f32 %v666, %v668
    %v670 = vadd.f32 %v666, %v669
    %vm671 = vweird.f32 %v664
    %vm672 = vweird.f32 %v666
    %vm673 = vmor %vm671, %vm672
    %v674 = vsel %vm673, %v666, %v670
    %v675 = vand.u32 2147483647, %v664
    %vm676 = vcmp.eq.f32.partialorder %v675, 8.507059e+37
    %v677 = vand.u32 %v664, 2147483648
    %v678 = vor.u32 1.1754944e-38, %v677
    %v679 = vsel %vm676, %v678, %v674
    %v680 = vmul.f32 1.0, %v679
    %v681 = vrcp.pop %v665
    %v682 = vmul.f32 %v665, %v681
    %v683 = vsub.f32 1.0, %v682
    %v684 = vmul.f32 %v681, %v683
    %v685 = vadd.f32 %v681, %v684
    %vm686 = vweird.f32 %v665
    %vm687 = vweird.f32 %v681
    %vm688 = vmor %vm686, %vm687
    %v689 = vsel %vm688, %v681, %v685
    %v690 = vand.u32 2147483647, %v665
    %vm691 = vcmp.eq.f32.partialorder %v690, 8.507059e+37
    %v692 = vand.u32 %v665, 2147483648
    %v693 = vor.u32 1.1754944e-38, %v692
    %v694 = vsel %vm691, %v693, %v689
    %v695 = vmul.f32 1.0, %v694
    %v696 = vmul.f32 %v656, %v680
    %v697 = vmul.f32 %v657, %v695
    %v698 = vld [vmem:[#allocation11] sm:$0xff]
    %v699 = vld [vmem:[#allocation11 + $0x8] sm:$0xff]
    %v700 = vld [vmem:[#allocation11 + $0x10] sm:$0xff]
    %v701 = vld [vmem:[#allocation11 + $0x18] sm:$0xff]
    %v702 = vld [vmem:[#allocation11 + $0x20] sm:$0xff]
    %v703 = vld [vmem:[#allocation11 + $0x28] sm:$0xff]
    %v704 = vld [vmem:[#allocation11 + $0x30] sm:$0xff]
    %v705 = vld [vmem:[#allocation11 + $0x38] sm:$0xff]
    %v706 = vld [vmem:[#allocation11 + $0x40] sm:$0xff]
    %v707 = vld [vmem:[#allocation11 + $0x48] sm:$0xff]
    %v708 = vld [vmem:[#allocation11 + $0x50] sm:$0xff]
    %v709 = vld [vmem:[#allocation11 + $0x58] sm:$0xff]
    %v710 = vld [vmem:[#allocation11 + $0x60] sm:$0xff]
    %v711 = vld [vmem:[#allocation11 + $0x68] sm:$0xff]
    %v712 = vld [vmem:[#allocation11 + $0x70] sm:$0xff]
    %v713 = vld [vmem:[#allocation11 + $0x78] sm:$0xff]
    %v714 = vld [vmem:[#allocation11 + $0x80] sm:$0xff]
    %v715 = vld [vmem:[#allocation11 + $0x88] sm:$0xff]
    %v716 = vld [vmem:[#allocation11 + $0x90] sm:$0xff]
    %v717 = vld [vmem:[#allocation11 + $0x98] sm:$0xff]
    %v718 = vld [vmem:[#allocation11 + $0xa0] sm:$0xff]
    %v719 = vld [vmem:[#allocation11 + $0xa8] sm:$0xff]
    %v720 = vld [vmem:[#allocation11 + $0xb0] sm:$0xff]
    %v721 = vld [vmem:[#allocation11 + $0xb8] sm:$0xff]
    %v722 = vld [vmem:[#allocation11 + $0xc0] sm:$0xff]
    %v723 = vld [vmem:[#allocation11 + $0xc8] sm:$0xff]
    %v724 = vld [vmem:[#allocation11 + $0xd0] sm:$0xff]
    %v725 = vld [vmem:[#allocation11 + $0xd8] sm:$0xff]
    %v726 = vld [vmem:[#allocation11 + $0xe0] sm:$0xff]
    %v727 = vld [vmem:[#allocation11 + $0xe8] sm:$0xff]
    %v728 = vld [vmem:[#allocation11 + $0xf0] sm:$0xff]
    %v729 = vld [vmem:[#allocation11 + $0xf8] sm:$0xff]
    %v730 = vld [vmem:[#allocation11 + $0x100] sm:$0xff]
    %v731 = vld [vmem:[#allocation11 + $0x108] sm:$0xff]
    %v732 = vld [vmem:[#allocation11 + $0x110] sm:$0xff]
    %v733 = vld [vmem:[#allocation11 + $0x118] sm:$0xff]
    %v734 = vld [vmem:[#allocation11 + $0x120] sm:$0xff]
    %v735 = vld [vmem:[#allocation11 + $0x128] sm:$0xff]
    %v736 = vld [vmem:[#allocation11 + $0x130] sm:$0xff]
    %v737 = vld [vmem:[#allocation11 + $0x138] sm:$0xff]
    %v738 = vld [vmem:[#allocation11 + $0x140] sm:$0xff]
    %v739 = vld [vmem:[#allocation11 + $0x148] sm:$0xff]
    %v740 = vld [vmem:[#allocation11 + $0x150] sm:$0xff]
    %v741 = vld [vmem:[#allocation11 + $0x158] sm:$0xff]
    %v742 = vld [vmem:[#allocation11 + $0x160] sm:$0xff]
    %v743 = vld [vmem:[#allocation11 + $0x168] sm:$0xff]
    %v744 = vld [vmem:[#allocation11 + $0x170] sm:$0xff]
    %v745 = vld [vmem:[#allocation11 + $0x178] sm:$0xff]
    %v746 = vld [vmem:[#allocation11 + $0x180] sm:$0xff]
    %v747 = vld [vmem:[#allocation11 + $0x188] sm:$0xff]
    %v748 = vld [vmem:[#allocation11 + $0x190] sm:$0xff]
    %v749 = vld [vmem:[#allocation11 + $0x198] sm:$0xff]
    %v750 = vld [vmem:[#allocation11 + $0x1a0] sm:$0xff]
    %v751 = vld [vmem:[#allocation11 + $0x1a8] sm:$0xff]
    %v752 = vld [vmem:[#allocation11 + $0x1b0] sm:$0xff]
    %v753 = vld [vmem:[#allocation11 + $0x1b8] sm:$0xff]
    %v754 = vld [vmem:[#allocation11 + $0x1c0] sm:$0xff]
    %v755 = vld [vmem:[#allocation11 + $0x1c8] sm:$0xff]
    %v756 = vld [vmem:[#allocation11 + $0x1d0] sm:$0xff]
    %v757 = vld [vmem:[#allocation11 + $0x1d8] sm:$0xff]
    %v758 = vld [vmem:[#allocation11 + $0x1e0] sm:$0xff]
    %v759 = vld [vmem:[#allocation11 + $0x1e8] sm:$0xff]
    %v760 = vld [vmem:[#allocation11 + $0x1f0] sm:$0xff]
    %v761 = vld [vmem:[#allocation11 + $0x1f8] sm:$0xff]
    %v762 = vld [vmem:[%s8] sm:$0x3]
    %v764 = vperm.slane %v762, 0
    %v765 = vperm.slane %v762, 1
    %768 = vmatpush.msra.mxu0 %v728
    %769 = vmatpush.msra.mxu0 %v726
    %770 = vmatpush.msra.mxu0 %v724
    %771 = vmatpush.msra.mxu0 %v722
    %772 = vmatpush.msra.mxu0 %v720
    %773 = vmatpush.msra.mxu0 %v718
    %774 = vmatpush.msra.mxu0 %v716
    %775 = vmatpush.msra.mxu0 %v714
    %776 = vmatpush.msra.mxu0 %v712
    %777 = vmatpush.msra.mxu0 %v710
    %778 = vmatpush.msra.mxu0 %v708
    %779 = vmatpush.msra.mxu0 %v706
    %780 = vmatpush.msra.mxu0 %v704
    %781 = vmatpush.msra.mxu0 %v702
    %782 = vmatpush.msra.mxu0 %v700
    %783 = vmatpush.msra.mxu0 %v698
    %784 = vmatmul.f32.gmra.mxu0 %v696
    %v785 = vpop.f32.mrf.mxu0
    %v786 = vadd.f32 %v764, %v785
    %787 = vdwg.mxu0
    %788 = vmatpush.msra.mxu0 %v760
    %789 = vmatpush.msra.mxu0 %v758
    %790 = vmatpush.msra.mxu0 %v756
    %791 = vmatpush.msra.mxu0 %v754
    %792 = vmatpush.msra.mxu0 %v752
    %793 = vmatpush.msra.mxu0 %v750
    %794 = vmatpush.msra.mxu0 %v748
    %795 = vmatpush.msra.mxu0 %v746
    %796 = vmatpush.msra.mxu0 %v744
    %797 = vmatpush.msra.mxu0 %v742
    %798 = vmatpush.msra.mxu0 %v740
    %799 = vmatpush.msra.mxu0 %v738
    %800 = vmatpush.msra.mxu0 %v736
    %801 = vmatpush.msra.mxu0 %v734
    %802 = vmatpush.msra.mxu0 %v732
    %803 = vmatpush.msra.mxu0 %v730
    %804 = vmatmul.f32.gmra.mxu0 %v697
    %v805 = vpop.f32.mrf.mxu0
    %v806 = vadd.f32 %v786, %v805
    %807 = vdwg.mxu0
    %808 = vmatpush.msra.mxu0 %v729
    %809 = vmatpush.msra.mxu0 %v727
    %810 = vmatpush.msra.mxu0 %v725
    %811 = vmatpush.msra.mxu0 %v723
    %812 = vmatpush.msra.mxu0 %v721
    %813 = vmatpush.msra.mxu0 %v719
    %814 = vmatpush.msra.mxu0 %v717
    %815 = vmatpush.msra.mxu0 %v715
    %816 = vmatpush.msra.mxu0 %v713
    %817 = vmatpush.msra.mxu0 %v711
    %818 = vmatpush.msra.mxu0 %v709
    %819 = vmatpush.msra.mxu0 %v707
    %820 = vmatpush.msra.mxu0 %v705
    %821 = vmatpush.msra.mxu0 %v703
    %822 = vmatpush.msra.mxu0 %v701
    %823 = vmatpush.msra.mxu0 %v699
    %824 = vmatmul.f32.gmra.mxu0 %v696
    %v825 = vpop.f32.mrf.mxu0
    %v826 = vadd.f32 %v765, %v825
    %827 = vdwg.mxu0
    %828 = vmatpush.msra.mxu0 %v761
    %829 = vmatpush.msra.mxu0 %v759
    %830 = vmatpush.msra.mxu0 %v757
    %831 = vmatpush.msra.mxu0 %v755
    %832 = vmatpush.msra.mxu0 %v753
    %833 = vmatpush.msra.mxu0 %v751
    %834 = vmatpush.msra.mxu0 %v749
    %835 = vmatpush.msra.mxu0 %v747
    %836 = vmatpush.msra.mxu0 %v745
    %837 = vmatpush.msra.mxu0 %v743
    %838 = vmatpush.msra.mxu0 %v741
    %839 = vmatpush.msra.mxu0 %v739
    %840 = vmatpush.msra.mxu0 %v737
    %841 = vmatpush.msra.mxu0 %v735
    %842 = vmatpush.msra.mxu0 %v733
    %843 = vmatpush.msra.mxu0 %v731
    %844 = vmatmul.f32.gmra.mxu0 %v697
    %v845 = vpop.f32.mrf.mxu0
    %v846 = vadd.f32 %v826, %v845
    %847 = vdwg.mxu0
    %v848 = vxor.u32 %v806, 2147483648
    %v849 = vxor.u32 %v846, 2147483648
    %v850 = vmul.f32 %v848, 1.442695
    %v851 = vpow.pop %v850
    %v852 = vmul.f32 %v849, 1.442695
    %v853 = vpow.pop %v852
    %v854 = vadd.f32 %v851, 1.0
    %v855 = vadd.f32 %v853, 1.0
    %v856 = vrcp.pop %v854
    %v857 = vmul.f32 %v854, %v856
    %v858 = vsub.f32 1.0, %v857
    %v859 = vmul.f32 %v856, %v858
    %v860 = vadd.f32 %v856, %v859
    %vm861 = vweird.f32 %v854
    %vm862 = vweird.f32 %v856
    %vm863 = vmor %vm861, %vm862
    %v864 = vsel %vm863, %v856, %v860
    %v865 = vand.u32 2147483647, %v854
    %vm866 = vcmp.eq.f32.partialorder %v865, 8.507059e+37
    %v867 = vand.u32 %v854, 2147483648
    %v868 = vor.u32 1.1754944e-38, %v867
    %v869 = vsel %vm866, %v868, %v864
    %v870 = vmul.f32 1.0, %v869
    %v871 = vrcp.pop %v855
    %v872 = vmul.f32 %v855, %v871
    %v873 = vsub.f32 1.0, %v872
    %v874 = vmul.f32 %v871, %v873
    %v875 = vadd.f32 %v871, %v874
    %vm876 = vweird.f32 %v855
    %vm877 = vweird.f32 %v871
    %vm878 = vmor %vm876, %vm877
    %v879 = vsel %vm878, %v871, %v875
    %v880 = vand.u32 2147483647, %v855
    %vm881 = vcmp.eq.f32.partialorder %v880, 8.507059e+37
    %v882 = vand.u32 %v855, 2147483648
    %v883 = vor.u32 1.1754944e-38, %v882
    %v884 = vsel %vm881, %v883, %v879
    %v885 = vmul.f32 1.0, %v884
    %v886 = vmul.f32 %v806, %v870
    %v887 = vmul.f32 %v846, %v885
    %s888 = scalar_lea.vmem [#allocation11], 512
    %v889 = vld [vmem:[%s888] sm:$0xff]
    %v890 = vld [vmem:[%s888 + $0x8] sm:$0xff]
    %v891 = vld [vmem:[%s888 + $0x10] sm:$0xff]
    %v892 = vld [vmem:[%s888 + $0x18] sm:$0xff]
    %v893 = vld [vmem:[%s888 + $0x20] sm:$0xff]
    %v894 = vld [vmem:[%s888 + $0x28] sm:$0xff]
    %v895 = vld [vmem:[%s888 + $0x30] sm:$0xff]
    %v896 = vld [vmem:[%s888 + $0x38] sm:$0xff]
    %v897 = vld [vmem:[%s888 + $0x40] sm:$0xff]
    %v898 = vld [vmem:[%s888 + $0x48] sm:$0xff]
    %v899 = vld [vmem:[%s888 + $0x50] sm:$0xff]
    %v900 = vld [vmem:[%s888 + $0x58] sm:$0xff]
    %v901 = vld [vmem:[%s888 + $0x60] sm:$0xff]
    %v902 = vld [vmem:[%s888 + $0x68] sm:$0xff]
    %v903 = vld [vmem:[%s888 + $0x70] sm:$0xff]
    %v904 = vld [vmem:[%s888 + $0x78] sm:$0xff]
    %v905 = vld [vmem:[%s888 + $0x80] sm:$0xff]
    %v906 = vld [vmem:[%s888 + $0x88] sm:$0xff]
    %v907 = vld [vmem:[%s888 + $0x90] sm:$0xff]
    %v908 = vld [vmem:[%s888 + $0x98] sm:$0xff]
    %v909 = vld [vmem:[%s888 + $0xa0] sm:$0xff]
    %v910 = vld [vmem:[%s888 + $0xa8] sm:$0xff]
    %v911 = vld [vmem:[%s888 + $0xb0] sm:$0xff]
    %v912 = vld [vmem:[%s888 + $0xb8] sm:$0xff]
    %v913 = vld [vmem:[%s888 + $0xc0] sm:$0xff]
    %v914 = vld [vmem:[%s888 + $0xc8] sm:$0xff]
    %v915 = vld [vmem:[%s888 + $0xd0] sm:$0xff]
    %v916 = vld [vmem:[%s888 + $0xd8] sm:$0xff]
    %v917 = vld [vmem:[%s888 + $0xe0] sm:$0xff]
    %v918 = vld [vmem:[%s888 + $0xe8] sm:$0xff]
    %v919 = vld [vmem:[%s888 + $0xf0] sm:$0xff]
    %v920 = vld [vmem:[%s888 + $0xf8] sm:$0xff]
    %v921 = vld [vmem:[%s888 + $0x100] sm:$0xff]
    %v922 = vld [vmem:[%s888 + $0x108] sm:$0xff]
    %v923 = vld [vmem:[%s888 + $0x110] sm:$0xff]
    %v924 = vld [vmem:[%s888 + $0x118] sm:$0xff]
    %v925 = vld [vmem:[%s888 + $0x120] sm:$0xff]
    %v926 = vld [vmem:[%s888 + $0x128] sm:$0xff]
    %v927 = vld [vmem:[%s888 + $0x130] sm:$0xff]
    %v928 = vld [vmem:[%s888 + $0x138] sm:$0xff]
    %v929 = vld [vmem:[%s888 + $0x140] sm:$0xff]
    %v930 = vld [vmem:[%s888 + $0x148] sm:$0xff]
    %v931 = vld [vmem:[%s888 + $0x150] sm:$0xff]
    %v932 = vld [vmem:[%s888 + $0x158] sm:$0xff]
    %v933 = vld [vmem:[%s888 + $0x160] sm:$0xff]
    %v934 = vld [vmem:[%s888 + $0x168] sm:$0xff]
    %v935 = vld [vmem:[%s888 + $0x170] sm:$0xff]
    %v936 = vld [vmem:[%s888 + $0x178] sm:$0xff]
    %v937 = vld [vmem:[%s888 + $0x180] sm:$0xff]
    %v938 = vld [vmem:[%s888 + $0x188] sm:$0xff]
    %v939 = vld [vmem:[%s888 + $0x190] sm:$0xff]
    %v940 = vld [vmem:[%s888 + $0x198] sm:$0xff]
    %v941 = vld [vmem:[%s888 + $0x1a0] sm:$0xff]
    %v942 = vld [vmem:[%s888 + $0x1a8] sm:$0xff]
    %v943 = vld [vmem:[%s888 + $0x1b0] sm:$0xff]
    %v944 = vld [vmem:[%s888 + $0x1b8] sm:$0xff]
    %v945 = vld [vmem:[%s888 + $0x1c0] sm:$0xff]
    %v946 = vld [vmem:[%s888 + $0x1c8] sm:$0xff]
    %v947 = vld [vmem:[%s888 + $0x1d0] sm:$0xff]
    %v948 = vld [vmem:[%s888 + $0x1d8] sm:$0xff]
    %v949 = vld [vmem:[%s888 + $0x1e0] sm:$0xff]
    %v950 = vld [vmem:[%s888 + $0x1e8] sm:$0xff]
    %v951 = vld [vmem:[%s888 + $0x1f0] sm:$0xff]
    %v952 = vld [vmem:[%s888 + $0x1f8] sm:$0xff]
    %s953 = scalar_lea.vmem %s8, 2
    %v954 = vld [vmem:[%s953] sm:$0x3]
    %v956 = vperm.slane %v954, 0
    %v957 = vperm.slane %v954, 1
    %960 = vmatpush.msra.mxu0 %v919
    %961 = vmatpush.msra.mxu0 %v917
    %962 = vmatpush.msra.mxu0 %v915
    %963 = vmatpush.msra.mxu0 %v913
    %964 = vmatpush.msra.mxu0 %v911
    %965 = vmatpush.msra.mxu0 %v909
    %966 = vmatpush.msra.mxu0 %v907
    %967 = vmatpush.msra.mxu0 %v905
    %968 = vmatpush.msra.mxu0 %v903
    %969 = vmatpush.msra.mxu0 %v901
    %970 = vmatpush.msra.mxu0 %v899
    %971 = vmatpush.msra.mxu0 %v897
    %972 = vmatpush.msra.mxu0 %v895
    %973 = vmatpush.msra.mxu0 %v893
    %974 = vmatpush.msra.mxu0 %v891
    %975 = vmatpush.msra.mxu0 %v889
    %976 = vmatmul.f32.gmra.mxu0 %v886
    %v977 = vpop.f32.mrf.mxu0
    %v978 = vadd.f32 %v956, %v977
    %979 = vdwg.mxu0
    %980 = vmatpush.msra.mxu0 %v951
    %981 = vmatpush.msra.mxu0 %v949
    %982 = vmatpush.msra.mxu0 %v947
    %983 = vmatpush.msra.mxu0 %v945
    %984 = vmatpush.msra.mxu0 %v943
    %985 = vmatpush.msra.mxu0 %v941
    %986 = vmatpush.msra.mxu0 %v939
    %987 = vmatpush.msra.mxu0 %v937
    %988 = vmatpush.msra.mxu0 %v935
    %989 = vmatpush.msra.mxu0 %v933
    %990 = vmatpush.msra.mxu0 %v931
    %991 = vmatpush.msra.mxu0 %v929
    %992 = vmatpush.msra.mxu0 %v927
    %993 = vmatpush.msra.mxu0 %v925
    %994 = vmatpush.msra.mxu0 %v923
    %995 = vmatpush.msra.mxu0 %v921
    %996 = vmatmul.f32.gmra.mxu0 %v887
    %v997 = vpop.f32.mrf.mxu0
    %v998 = vadd.f32 %v978, %v997
    %999 = vdwg.mxu0
    %1000 = vmatpush.msra.mxu0 %v920
    %1001 = vmatpush.msra.mxu0 %v918
    %1002 = vmatpush.msra.mxu0 %v916
    %1003 = vmatpush.msra.mxu0 %v914
    %1004 = vmatpush.msra.mxu0 %v912
    %1005 = vmatpush.msra.mxu0 %v910
    %1006 = vmatpush.msra.mxu0 %v908
    %1007 = vmatpush.msra.mxu0 %v906
    %1008 = vmatpush.msra.mxu0 %v904
    %1009 = vmatpush.msra.mxu0 %v902
    %1010 = vmatpush.msra.mxu0 %v900
    %1011 = vmatpush.msra.mxu0 %v898
    %1012 = vmatpush.msra.mxu0 %v896
    %1013 = vmatpush.msra.mxu0 %v894
    %1014 = vmatpush.msra.mxu0 %v892
    %1015 = vmatpush.msra.mxu0 %v890
    %1016 = vmatmul.f32.gmra.mxu0 %v886
    %v1017 = vpop.f32.mrf.mxu0
    %v1018 = vadd.f32 %v957, %v1017
    %1019 = vdwg.mxu0
    %1020 = vmatpush.msra.mxu0 %v952
    %1021 = vmatpush.msra.mxu0 %v950
    %1022 = vmatpush.msra.mxu0 %v948
    %1023 = vmatpush.msra.mxu0 %v946
    %1024 = vmatpush.msra.mxu0 %v944
    %1025 = vmatpush.msra.mxu0 %v942
    %1026 = vmatpush.msra.mxu0 %v940
    %1027 = vmatpush.msra.mxu0 %v938
    %1028 = vmatpush.msra.mxu0 %v936
    %1029 = vmatpush.msra.mxu0 %v934
    %1030 = vmatpush.msra.mxu0 %v932
    %1031 = vmatpush.msra.mxu0 %v930
    %1032 = vmatpush.msra.mxu0 %v928
    %1033 = vmatpush.msra.mxu0 %v926
    %1034 = vmatpush.msra.mxu0 %v924
    %1035 = vmatpush.msra.mxu0 %v922
    %1036 = vmatmul.f32.gmra.mxu0 %v887
    %v1037 = vpop.f32.mrf.mxu0
    %v1038 = vadd.f32 %v1018, %v1037
    %1039 = vdwg.mxu0
    %v1040 = vxor.u32 %v998, 2147483648
    %v1041 = vxor.u32 %v1038, 2147483648
    %v1042 = vmul.f32 %v1040, 1.442695
    %v1043 = vpow.pop %v1042
    %v1044 = vmul.f32 %v1041, 1.442695
    %v1045 = vpow.pop %v1044
    %v1046 = vadd.f32 %v1043, 1.0
    %v1047 = vadd.f32 %v1045, 1.0
    %v1048 = vrcp.pop %v1046
    %v1049 = vmul.f32 %v1046, %v1048
    %v1050 = vsub.f32 1.0, %v1049
    %v1051 = vmul.f32 %v1048, %v1050
    %v1052 = vadd.f32 %v1048, %v1051
    %vm1053 = vweird.f32 %v1046
    %vm1054 = vweird.f32 %v1048
    %vm1055 = vmor %vm1053, %vm1054
    %v1056 = vsel %vm1055, %v1048, %v1052
    %v1057 = vand.u32 2147483647, %v1046
    %vm1058 = vcmp.eq.f32.partialorder %v1057, 8.507059e+37
    %v1059 = vand.u32 %v1046, 2147483648
    %v1060 = vor.u32 1.1754944e-38, %v1059
    %v1061 = vsel %vm1058, %v1060, %v1056
    %v1062 = vmul.f32 1.0, %v1061
    %v1063 = vrcp.pop %v1047
    %v1064 = vmul.f32 %v1047, %v1063
    %v1065 = vsub.f32 1.0, %v1064
    %v1066 = vmul.f32 %v1063, %v1065
    %v1067 = vadd.f32 %v1063, %v1066
    %vm1068 = vweird.f32 %v1047
    %vm1069 = vweird.f32 %v1063
    %vm1070 = vmor %vm1068, %vm1069
    %v1071 = vsel %vm1070, %v1063, %v1067
    %v1072 = vand.u32 2147483647, %v1047
    %vm1073 = vcmp.eq.f32.partialorder %v1072, 8.507059e+37
    %v1074 = vand.u32 %v1047, 2147483648
    %v1075 = vor.u32 1.1754944e-38, %v1074
    %v1076 = vsel %vm1073, %v1075, %v1071
    %v1077 = vmul.f32 1.0, %v1076
    %v1078 = vmul.f32 %v998, %v1062
    %v1079 = vmul.f32 %v1038, %v1077
    %s1080 = scalar_lea.vmem [#allocation11], 1024
    %v1081 = vld [vmem:[%s1080] sm:$0xff]
    %v1082 = vld [vmem:[%s1080 + $0x8] sm:$0xff]
    %v1083 = vld [vmem:[%s1080 + $0x10] sm:$0xff]
    %v1084 = vld [vmem:[%s1080 + $0x18] sm:$0xff]
    %v1085 = vld [vmem:[%s1080 + $0x20] sm:$0xff]
    %v1086 = vld [vmem:[%s1080 + $0x28] sm:$0xff]
    %v1087 = vld [vmem:[%s1080 + $0x30] sm:$0xff]
    %v1088 = vld [vmem:[%s1080 + $0x38] sm:$0xff]
    %v1089 = vld [vmem:[%s1080 + $0x40] sm:$0xff]
    %v1090 = vld [vmem:[%s1080 + $0x48] sm:$0xff]
    %v1091 = vld [vmem:[%s1080 + $0x50] sm:$0xff]
    %v1092 = vld [vmem:[%s1080 + $0x58] sm:$0xff]
    %v1093 = vld [vmem:[%s1080 + $0x60] sm:$0xff]
    %v1094 = vld [vmem:[%s1080 + $0x68] sm:$0xff]
    %v1095 = vld [vmem:[%s1080 + $0x70] sm:$0xff]
    %v1096 = vld [vmem:[%s1080 + $0x78] sm:$0xff]
    %v1097 = vld [vmem:[%s1080 + $0x80] sm:$0xff]
    %v1098 = vld [vmem:[%s1080 + $0x88] sm:$0xff]
    %v1099 = vld [vmem:[%s1080 + $0x90] sm:$0xff]
    %v1100 = vld [vmem:[%s1080 + $0x98] sm:$0xff]
    %v1101 = vld [vmem:[%s1080 + $0xa0] sm:$0xff]
    %v1102 = vld [vmem:[%s1080 + $0xa8] sm:$0xff]
    %v1103 = vld [vmem:[%s1080 + $0xb0] sm:$0xff]
    %v1104 = vld [vmem:[%s1080 + $0xb8] sm:$0xff]
    %v1105 = vld [vmem:[%s1080 + $0xc0] sm:$0xff]
    %v1106 = vld [vmem:[%s1080 + $0xc8] sm:$0xff]
    %v1107 = vld [vmem:[%s1080 + $0xd0] sm:$0xff]
    %v1108 = vld [vmem:[%s1080 + $0xd8] sm:$0xff]
    %v1109 = vld [vmem:[%s1080 + $0xe0] sm:$0xff]
    %v1110 = vld [vmem:[%s1080 + $0xe8] sm:$0xff]
    %v1111 = vld [vmem:[%s1080 + $0xf0] sm:$0xff]
    %v1112 = vld [vmem:[%s1080 + $0xf8] sm:$0xff]
    %v1113 = vld [vmem:[%s1080 + $0x100] sm:$0xff]
    %v1114 = vld [vmem:[%s1080 + $0x108] sm:$0xff]
    %v1115 = vld [vmem:[%s1080 + $0x110] sm:$0xff]
    %v1116 = vld [vmem:[%s1080 + $0x118] sm:$0xff]
    %v1117 = vld [vmem:[%s1080 + $0x120] sm:$0xff]
    %v1118 = vld [vmem:[%s1080 + $0x128] sm:$0xff]
    %v1119 = vld [vmem:[%s1080 + $0x130] sm:$0xff]
    %v1120 = vld [vmem:[%s1080 + $0x138] sm:$0xff]
    %v1121 = vld [vmem:[%s1080 + $0x140] sm:$0xff]
    %v1122 = vld [vmem:[%s1080 + $0x148] sm:$0xff]
    %v1123 = vld [vmem:[%s1080 + $0x150] sm:$0xff]
    %v1124 = vld [vmem:[%s1080 + $0x158] sm:$0xff]
    %v1125 = vld [vmem:[%s1080 + $0x160] sm:$0xff]
    %v1126 = vld [vmem:[%s1080 + $0x168] sm:$0xff]
    %v1127 = vld [vmem:[%s1080 + $0x170] sm:$0xff]
    %v1128 = vld [vmem:[%s1080 + $0x178] sm:$0xff]
    %v1129 = vld [vmem:[%s1080 + $0x180] sm:$0xff]
    %v1130 = vld [vmem:[%s1080 + $0x188] sm:$0xff]
    %v1131 = vld [vmem:[%s1080 + $0x190] sm:$0xff]
    %v1132 = vld [vmem:[%s1080 + $0x198] sm:$0xff]
    %v1133 = vld [vmem:[%s1080 + $0x1a0] sm:$0xff]
    %v1134 = vld [vmem:[%s1080 + $0x1a8] sm:$0xff]
    %v1135 = vld [vmem:[%s1080 + $0x1b0] sm:$0xff]
    %v1136 = vld [vmem:[%s1080 + $0x1b8] sm:$0xff]
    %v1137 = vld [vmem:[%s1080 + $0x1c0] sm:$0xff]
    %v1138 = vld [vmem:[%s1080 + $0x1c8] sm:$0xff]
    %v1139 = vld [vmem:[%s1080 + $0x1d0] sm:$0xff]
    %v1140 = vld [vmem:[%s1080 + $0x1d8] sm:$0xff]
    %v1141 = vld [vmem:[%s1080 + $0x1e0] sm:$0xff]
    %v1142 = vld [vmem:[%s1080 + $0x1e8] sm:$0xff]
    %v1143 = vld [vmem:[%s1080 + $0x1f0] sm:$0xff]
    %v1144 = vld [vmem:[%s1080 + $0x1f8] sm:$0xff]
    %s1145 = scalar_lea.vmem %s8, 4
    %v1146 = vld [vmem:[%s1145] sm:$0x3]
    %v1148 = vperm.slane %v1146, 0
    %v1149 = vperm.slane %v1146, 1
    %1152 = vmatpush.msra.mxu0 %v1111
    %1153 = vmatpush.msra.mxu0 %v1109
    %1154 = vmatpush.msra.mxu0 %v1107
    %1155 = vmatpush.msra.mxu0 %v1105
    %1156 = vmatpush.msra.mxu0 %v1103
    %1157 = vmatpush.msra.mxu0 %v1101
    %1158 = vmatpush.msra.mxu0 %v1099
    %1159 = vmatpush.msra.mxu0 %v1097
    %1160 = vmatpush.msra.mxu0 %v1095
    %1161 = vmatpush.msra.mxu0 %v1093
    %1162 = vmatpush.msra.mxu0 %v1091
    %1163 = vmatpush.msra.mxu0 %v1089
    %1164 = vmatpush.msra.mxu0 %v1087
    %1165 = vmatpush.msra.mxu0 %v1085
    %1166 = vmatpush.msra.mxu0 %v1083
    %1167 = vmatpush.msra.mxu0 %v1081
    %1168 = vmatmul.f32.gmra.mxu0 %v1078
    %v1169 = vpop.f32.mrf.mxu0
    %v1170 = vadd.f32 %v1148, %v1169
    %1171 = vdwg.mxu0
    %1172 = vmatpush.msra.mxu0 %v1143
    %1173 = vmatpush.msra.mxu0 %v1141
    %1174 = vmatpush.msra.mxu0 %v1139
    %1175 = vmatpush.msra.mxu0 %v1137
    %1176 = vmatpush.msra.mxu0 %v1135
    %1177 = vmatpush.msra.mxu0 %v1133
    %1178 = vmatpush.msra.mxu0 %v1131
    %1179 = vmatpush.msra.mxu0 %v1129
    %1180 = vmatpush.msra.mxu0 %v1127
    %1181 = vmatpush.msra.mxu0 %v1125
    %1182 = vmatpush.msra.mxu0 %v1123
    %1183 = vmatpush.msra.mxu0 %v1121
    %1184 = vmatpush.msra.mxu0 %v1119
    %1185 = vmatpush.msra.mxu0 %v1117
    %1186 = vmatpush.msra.mxu0 %v1115
    %1187 = vmatpush.msra.mxu0 %v1113
    %1188 = vmatmul.f32.gmra.mxu0 %v1079
    %v1189 = vpop.f32.mrf.mxu0
    %v1190 = vadd.f32 %v1170, %v1189
    %1191 = vdwg.mxu0
    %1192 = vmatpush.msra.mxu0 %v1112
    %1193 = vmatpush.msra.mxu0 %v1110
    %1194 = vmatpush.msra.mxu0 %v1108
    %1195 = vmatpush.msra.mxu0 %v1106
    %1196 = vmatpush.msra.mxu0 %v1104
    %1197 = vmatpush.msra.mxu0 %v1102
    %1198 = vmatpush.msra.mxu0 %v1100
    %1199 = vmatpush.msra.mxu0 %v1098
    %1200 = vmatpush.msra.mxu0 %v1096
    %1201 = vmatpush.msra.mxu0 %v1094
    %1202 = vmatpush.msra.mxu0 %v1092
    %1203 = vmatpush.msra.mxu0 %v1090
    %1204 = vmatpush.msra.mxu0 %v1088
    %1205 = vmatpush.msra.mxu0 %v1086
    %1206 = vmatpush.msra.mxu0 %v1084
    %1207 = vmatpush.msra.mxu0 %v1082
    %1208 = vmatmul.f32.gmra.mxu0 %v1078
    %v1209 = vpop.f32.mrf.mxu0
    %v1210 = vadd.f32 %v1149, %v1209
    %1211 = vdwg.mxu0
    %1212 = vmatpush.msra.mxu0 %v1144
    %1213 = vmatpush.msra.mxu0 %v1142
    %1214 = vmatpush.msra.mxu0 %v1140
    %1215 = vmatpush.msra.mxu0 %v1138
    %1216 = vmatpush.msra.mxu0 %v1136
    %1217 = vmatpush.msra.mxu0 %v1134
    %1218 = vmatpush.msra.mxu0 %v1132
    %1219 = vmatpush.msra.mxu0 %v1130
    %1220 = vmatpush.msra.mxu0 %v1128
    %1221 = vmatpush.msra.mxu0 %v1126
    %1222 = vmatpush.msra.mxu0 %v1124
    %1223 = vmatpush.msra.mxu0 %v1122
    %1224 = vmatpush.msra.mxu0 %v1120
    %1225 = vmatpush.msra.mxu0 %v1118
    %1226 = vmatpush.msra.mxu0 %v1116
    %1227 = vmatpush.msra.mxu0 %v1114
    %1228 = vmatmul.f32.gmra.mxu0 %v1079
    %v1229 = vpop.f32.mrf.mxu0
    %v1230 = vadd.f32 %v1210, %v1229
    %1231 = vdwg.mxu0
    %v1232 = vxor.u32 %v1190, 2147483648
    %v1233 = vxor.u32 %v1230, 2147483648
    %v1234 = vmul.f32 %v1232, 1.442695
    %v1235 = vpow.pop %v1234
    %v1236 = vmul.f32 %v1233, 1.442695
    %v1237 = vpow.pop %v1236
    %v1238 = vadd.f32 %v1235, 1.0
    %v1239 = vadd.f32 %v1237, 1.0
    %v1240 = vrcp.pop %v1238
    %v1241 = vmul.f32 %v1238, %v1240
    %v1242 = vsub.f32 1.0, %v1241
    %v1243 = vmul.f32 %v1240, %v1242
    %v1244 = vadd.f32 %v1240, %v1243
    %vm1245 = vweird.f32 %v1238
    %vm1246 = vweird.f32 %v1240
    %vm1247 = vmor %vm1245, %vm1246
    %v1248 = vsel %vm1247, %v1240, %v1244
    %v1249 = vand.u32 2147483647, %v1238
    %vm1250 = vcmp.eq.f32.partialorder %v1249, 8.507059e+37
    %v1251 = vand.u32 %v1238, 2147483648
    %v1252 = vor.u32 1.1754944e-38, %v1251
    %v1253 = vsel %vm1250, %v1252, %v1248
    %v1254 = vmul.f32 1.0, %v1253
    %v1255 = vrcp.pop %v1239
    %v1256 = vmul.f32 %v1239, %v1255
    %v1257 = vsub.f32 1.0, %v1256
    %v1258 = vmul.f32 %v1255, %v1257
    %v1259 = vadd.f32 %v1255, %v1258
    %vm1260 = vweird.f32 %v1239
    %vm1261 = vweird.f32 %v1255
    %vm1262 = vmor %vm1260, %vm1261
    %v1263 = vsel %vm1262, %v1255, %v1259
    %v1264 = vand.u32 2147483647, %v1239
    %vm1265 = vcmp.eq.f32.partialorder %v1264, 8.507059e+37
    %v1266 = vand.u32 %v1239, 2147483648
    %v1267 = vor.u32 1.1754944e-38, %v1266
    %v1268 = vsel %vm1265, %v1267, %v1263
    %v1269 = vmul.f32 1.0, %v1268
    %v1270 = vmul.f32 %v1190, %v1254
    %v1271 = vmul.f32 %v1230, %v1269
    %s1272 = scalar_lea.vmem [#allocation11], 1536
    %v1273 = vld [vmem:[%s1272] sm:$0xff]
    %v1274 = vld [vmem:[%s1272 + $0x8] sm:$0xff]
    %v1275 = vld [vmem:[%s1272 + $0x10] sm:$0xff]
    %v1276 = vld [vmem:[%s1272 + $0x18] sm:$0xff]
    %v1277 = vld [vmem:[%s1272 + $0x20] sm:$0xff]
    %v1278 = vld [vmem:[%s1272 + $0x28] sm:$0xff]
    %v1279 = vld [vmem:[%s1272 + $0x30] sm:$0xff]
    %v1280 = vld [vmem:[%s1272 + $0x38] sm:$0xff]
    %v1281 = vld [vmem:[%s1272 + $0x40] sm:$0xff]
    %v1282 = vld [vmem:[%s1272 + $0x48] sm:$0xff]
    %v1283 = vld [vmem:[%s1272 + $0x50] sm:$0xff]
    %v1284 = vld [vmem:[%s1272 + $0x58] sm:$0xff]
    %v1285 = vld [vmem:[%s1272 + $0x60] sm:$0xff]
    %v1286 = vld [vmem:[%s1272 + $0x68] sm:$0xff]
    %v1287 = vld [vmem:[%s1272 + $0x70] sm:$0xff]
    %v1288 = vld [vmem:[%s1272 + $0x78] sm:$0xff]
    %v1289 = vld [vmem:[%s1272 + $0x80] sm:$0xff]
    %v1290 = vld [vmem:[%s1272 + $0x88] sm:$0xff]
    %v1291 = vld [vmem:[%s1272 + $0x90] sm:$0xff]
    %v1292 = vld [vmem:[%s1272 + $0x98] sm:$0xff]
    %v1293 = vld [vmem:[%s1272 + $0xa0] sm:$0xff]
    %v1294 = vld [vmem:[%s1272 + $0xa8] sm:$0xff]
    %v1295 = vld [vmem:[%s1272 + $0xb0] sm:$0xff]
    %v1296 = vld [vmem:[%s1272 + $0xb8] sm:$0xff]
    %v1297 = vld [vmem:[%s1272 + $0xc0] sm:$0xff]
    %v1298 = vld [vmem:[%s1272 + $0xc8] sm:$0xff]
    %v1299 = vld [vmem:[%s1272 + $0xd0] sm:$0xff]
    %v1300 = vld [vmem:[%s1272 + $0xd8] sm:$0xff]
    %v1301 = vld [vmem:[%s1272 + $0xe0] sm:$0xff]
    %v1302 = vld [vmem:[%s1272 + $0xe8] sm:$0xff]
    %v1303 = vld [vmem:[%s1272 + $0xf0] sm:$0xff]
    %v1304 = vld [vmem:[%s1272 + $0xf8] sm:$0xff]
    %v1305 = vld [vmem:[%s1272 + $0x100] sm:$0xff]
    %v1306 = vld [vmem:[%s1272 + $0x108] sm:$0xff]
    %v1307 = vld [vmem:[%s1272 + $0x110] sm:$0xff]
    %v1308 = vld [vmem:[%s1272 + $0x118] sm:$0xff]
    %v1309 = vld [vmem:[%s1272 + $0x120] sm:$0xff]
    %v1310 = vld [vmem:[%s1272 + $0x128] sm:$0xff]
    %v1311 = vld [vmem:[%s1272 + $0x130] sm:$0xff]
    %v1312 = vld [vmem:[%s1272 + $0x138] sm:$0xff]
    %v1313 = vld [vmem:[%s1272 + $0x140] sm:$0xff]
    %v1314 = vld [vmem:[%s1272 + $0x148] sm:$0xff]
    %v1315 = vld [vmem:[%s1272 + $0x150] sm:$0xff]
    %v1316 = vld [vmem:[%s1272 + $0x158] sm:$0xff]
    %v1317 = vld [vmem:[%s1272 + $0x160] sm:$0xff]
    %v1318 = vld [vmem:[%s1272 + $0x168] sm:$0xff]
    %v1319 = vld [vmem:[%s1272 + $0x170] sm:$0xff]
    %v1320 = vld [vmem:[%s1272 + $0x178] sm:$0xff]
    %v1321 = vld [vmem:[%s1272 + $0x180] sm:$0xff]
    %v1322 = vld [vmem:[%s1272 + $0x188] sm:$0xff]
    %v1323 = vld [vmem:[%s1272 + $0x190] sm:$0xff]
    %v1324 = vld [vmem:[%s1272 + $0x198] sm:$0xff]
    %v1325 = vld [vmem:[%s1272 + $0x1a0] sm:$0xff]
    %v1326 = vld [vmem:[%s1272 + $0x1a8] sm:$0xff]
    %v1327 = vld [vmem:[%s1272 + $0x1b0] sm:$0xff]
    %v1328 = vld [vmem:[%s1272 + $0x1b8] sm:$0xff]
    %v1329 = vld [vmem:[%s1272 + $0x1c0] sm:$0xff]
    %v1330 = vld [vmem:[%s1272 + $0x1c8] sm:$0xff]
    %v1331 = vld [vmem:[%s1272 + $0x1d0] sm:$0xff]
    %v1332 = vld [vmem:[%s1272 + $0x1d8] sm:$0xff]
    %v1333 = vld [vmem:[%s1272 + $0x1e0] sm:$0xff]
    %v1334 = vld [vmem:[%s1272 + $0x1e8] sm:$0xff]
    %v1335 = vld [vmem:[%s1272 + $0x1f0] sm:$0xff]
    %v1336 = vld [vmem:[%s1272 + $0x1f8] sm:$0xff]
    %s1337 = scalar_lea.vmem %s8, 6
    %v1338 = vld [vmem:[%s1337] sm:$0x3]
    %v1340 = vperm.slane %v1338, 0
    %v1341 = vperm.slane %v1338, 1
    %1344 = vmatpush.msra.mxu0 %v1303
    %1345 = vmatpush.msra.mxu0 %v1301
    %1346 = vmatpush.msra.mxu0 %v1299
    %1347 = vmatpush.msra.mxu0 %v1297
    %1348 = vmatpush.msra.mxu0 %v1295
    %1349 = vmatpush.msra.mxu0 %v1293
    %1350 = vmatpush.msra.mxu0 %v1291
    %1351 = vmatpush.msra.mxu0 %v1289
    %1352 = vmatpush.msra.mxu0 %v1287
    %1353 = vmatpush.msra.mxu0 %v1285
    %1354 = vmatpush.msra.mxu0 %v1283
    %1355 = vmatpush.msra.mxu0 %v1281
    %1356 = vmatpush.msra.mxu0 %v1279
    %1357 = vmatpush.msra.mxu0 %v1277
    %1358 = vmatpush.msra.mxu0 %v1275
    %1359 = vmatpush.msra.mxu0 %v1273
    %1360 = vmatmul.f32.gmra.mxu0 %v1270
    %v1361 = vpop.f32.mrf.mxu0
    %v1362 = vadd.f32 %v1340, %v1361
    %1363 = vdwg.mxu0
    %1364 = vmatpush.msra.mxu0 %v1335
    %1365 = vmatpush.msra.mxu0 %v1333
    %1366 = vmatpush.msra.mxu0 %v1331
    %1367 = vmatpush.msra.mxu0 %v1329
    %1368 = vmatpush.msra.mxu0 %v1327
    %1369 = vmatpush.msra.mxu0 %v1325
    %1370 = vmatpush.msra.mxu0 %v1323
    %1371 = vmatpush.msra.mxu0 %v1321
    %1372 = vmatpush.msra.mxu0 %v1319
    %1373 = vmatpush.msra.mxu0 %v1317
    %1374 = vmatpush.msra.mxu0 %v1315
    %1375 = vmatpush.msra.mxu0 %v1313
    %1376 = vmatpush.msra.mxu0 %v1311
    %1377 = vmatpush.msra.mxu0 %v1309
    %1378 = vmatpush.msra.mxu0 %v1307
    %1379 = vmatpush.msra.mxu0 %v1305
    %1380 = vmatmul.f32.gmra.mxu0 %v1271
    %v1381 = vpop.f32.mrf.mxu0
    %v1382 = vadd.f32 %v1362, %v1381
    %1383 = vdwg.mxu0
    %1384 = vmatpush.msra.mxu0 %v1304
    %1385 = vmatpush.msra.mxu0 %v1302
    %1386 = vmatpush.msra.mxu0 %v1300
    %1387 = vmatpush.msra.mxu0 %v1298
    %1388 = vmatpush.msra.mxu0 %v1296
    %1389 = vmatpush.msra.mxu0 %v1294
    %1390 = vmatpush.msra.mxu0 %v1292
    %1391 = vmatpush.msra.mxu0 %v1290
    %1392 = vmatpush.msra.mxu0 %v1288
    %1393 = vmatpush.msra.mxu0 %v1286
    %1394 = vmatpush.msra.mxu0 %v1284
    %1395 = vmatpush.msra.mxu0 %v1282
    %1396 = vmatpush.msra.mxu0 %v1280
    %1397 = vmatpush.msra.mxu0 %v1278
    %1398 = vmatpush.msra.mxu0 %v1276
    %1399 = vmatpush.msra.mxu0 %v1274
    %1400 = vmatmul.f32.gmra.mxu0 %v1270
    %v1401 = vpop.f32.mrf.mxu0
    %v1402 = vadd.f32 %v1341, %v1401
    %1403 = vdwg.mxu0
    %1404 = vmatpush.msra.mxu0 %v1336
    %1405 = vmatpush.msra.mxu0 %v1334
    %1406 = vmatpush.msra.mxu0 %v1332
    %1407 = vmatpush.msra.mxu0 %v1330
    %1408 = vmatpush.msra.mxu0 %v1328
    %1409 = vmatpush.msra.mxu0 %v1326
    %1410 = vmatpush.msra.mxu0 %v1324
    %1411 = vmatpush.msra.mxu0 %v1322
    %1412 = vmatpush.msra.mxu0 %v1320
    %1413 = vmatpush.msra.mxu0 %v1318
    %1414 = vmatpush.msra.mxu0 %v1316
    %1415 = vmatpush.msra.mxu0 %v1314
    %1416 = vmatpush.msra.mxu0 %v1312
    %1417 = vmatpush.msra.mxu0 %v1310
    %1418 = vmatpush.msra.mxu0 %v1308
    %1419 = vmatpush.msra.mxu0 %v1306
    %1420 = vmatmul.f32.gmra.mxu0 %v1271
    %v1421 = vpop.f32.mrf.mxu0
    %v1422 = vadd.f32 %v1402, %v1421
    %1423 = vdwg.mxu0
    %v1424 = vxor.u32 %v1382, 2147483648
    %v1425 = vxor.u32 %v1422, 2147483648
    %v1426 = vmul.f32 %v1424, 1.442695
    %v1427 = vpow.pop %v1426
    %v1428 = vmul.f32 %v1425, 1.442695
    %v1429 = vpow.pop %v1428
    %v1430 = vadd.f32 %v1427, 1.0
    %v1431 = vadd.f32 %v1429, 1.0
    %v1432 = vrcp.pop %v1430
    %v1433 = vmul.f32 %v1430, %v1432
    %v1434 = vsub.f32 1.0, %v1433
    %v1435 = vmul.f32 %v1432, %v1434
    %v1436 = vadd.f32 %v1432, %v1435
    %vm1437 = vweird.f32 %v1430
    %vm1438 = vweird.f32 %v1432
    %vm1439 = vmor %vm1437, %vm1438
    %v1440 = vsel %vm1439, %v1432, %v1436
    %v1441 = vand.u32 2147483647, %v1430
    %vm1442 = vcmp.eq.f32.partialorder %v1441, 8.507059e+37
    %v1443 = vand.u32 %v1430, 2147483648
    %v1444 = vor.u32 1.1754944e-38, %v1443
    %v1445 = vsel %vm1442, %v1444, %v1440
    %v1446 = vmul.f32 1.0, %v1445
    %v1447 = vrcp.pop %v1431
    %v1448 = vmul.f32 %v1431, %v1447
    %v1449 = vsub.f32 1.0, %v1448
    %v1450 = vmul.f32 %v1447, %v1449
    %v1451 = vadd.f32 %v1447, %v1450
    %vm1452 = vweird.f32 %v1431
    %vm1453 = vweird.f32 %v1447
    %vm1454 = vmor %vm1452, %vm1453
    %v1455 = vsel %vm1454, %v1447, %v1451
    %v1456 = vand.u32 2147483647, %v1431
    %vm1457 = vcmp.eq.f32.partialorder %v1456, 8.507059e+37
    %v1458 = vand.u32 %v1431, 2147483648
    %v1459 = vor.u32 1.1754944e-38, %v1458
    %v1460 = vsel %vm1457, %v1459, %v1455
    %v1461 = vmul.f32 1.0, %v1460
    %v1462 = vmul.f32 %v1382, %v1446
    %v1463 = vmul.f32 %v1422, %v1461
    %v1464 = vld [vmem:[#allocation13] sm:$0xff]
    %v1465 = vld [vmem:[#allocation13 + $0x8] sm:$0xff]
    %v1466 = vld [vmem:[#allocation13 + $0x10] sm:$0xff]
    %v1467 = vld [vmem:[#allocation13 + $0x18] sm:$0xff]
    %v1468 = vld [vmem:[#allocation13 + $0x20] sm:$0xff]
    %v1469 = vld [vmem:[#allocation13 + $0x28] sm:$0xff]
    %v1470 = vld [vmem:[#allocation13 + $0x30] sm:$0xff]
    %v1471 = vld [vmem:[#allocation13 + $0x38] sm:$0xff]
    %v1472 = vld [vmem:[#allocation13 + $0x40] sm:$0xff]
    %v1473 = vld [vmem:[#allocation13 + $0x48] sm:$0xff]
    %v1474 = vld [vmem:[#allocation13 + $0x50] sm:$0xff]
    %v1475 = vld [vmem:[#allocation13 + $0x58] sm:$0xff]
    %v1476 = vld [vmem:[#allocation13 + $0x60] sm:$0xff]
    %v1477 = vld [vmem:[#allocation13 + $0x68] sm:$0xff]
    %v1478 = vld [vmem:[#allocation13 + $0x70] sm:$0xff]
    %v1479 = vld [vmem:[#allocation13 + $0x78] sm:$0xff]
    %v1480 = vld [vmem:[#allocation13 + $0x80] sm:$0xff]
    %v1481 = vld [vmem:[#allocation13 + $0x88] sm:$0xff]
    %v1482 = vld [vmem:[#allocation13 + $0x90] sm:$0xff]
    %v1483 = vld [vmem:[#allocation13 + $0x98] sm:$0xff]
    %v1484 = vld [vmem:[#allocation13 + $0xa0] sm:$0xff]
    %v1485 = vld [vmem:[#allocation13 + $0xa8] sm:$0xff]
    %v1486 = vld [vmem:[#allocation13 + $0xb0] sm:$0xff]
    %v1487 = vld [vmem:[#allocation13 + $0xb8] sm:$0xff]
    %v1488 = vld [vmem:[#allocation13 + $0xc0] sm:$0xff]
    %v1489 = vld [vmem:[#allocation13 + $0xc8] sm:$0xff]
    %v1490 = vld [vmem:[#allocation13 + $0xd0] sm:$0xff]
    %v1491 = vld [vmem:[#allocation13 + $0xd8] sm:$0xff]
    %v1492 = vld [vmem:[#allocation13 + $0xe0] sm:$0xff]
    %v1493 = vld [vmem:[#allocation13 + $0xe8] sm:$0xff]
    %v1494 = vld [vmem:[#allocation13 + $0xf0] sm:$0xff]
    %v1495 = vld [vmem:[#allocation13 + $0xf8] sm:$0xff]
    %v1496 = vld [vmem:[%s10] sm:$0x1]
    %v1498 = vperm.slane %v1496, 0
    %1500 = vmatpush.msra.mxu0 %v1479
    %1501 = vmatpush.msra.mxu0 %v1478
    %1502 = vmatpush.msra.mxu0 %v1477
    %1503 = vmatpush.msra.mxu0 %v1476
    %1504 = vmatpush.msra.mxu0 %v1475
    %1505 = vmatpush.msra.mxu0 %v1474
    %1506 = vmatpush.msra.mxu0 %v1473
    %1507 = vmatpush.msra.mxu0 %v1472
    %1508 = vmatpush.msra.mxu0 %v1471
    %1509 = vmatpush.msra.mxu0 %v1470
    %1510 = vmatpush.msra.mxu0 %v1469
    %1511 = vmatpush.msra.mxu0 %v1468
    %1512 = vmatpush.msra.mxu0 %v1467
    %1513 = vmatpush.msra.mxu0 %v1466
    %1514 = vmatpush.msra.mxu0 %v1465
    %1515 = vmatpush.msra.mxu0 %v1464
    %1516 = vmatmul.f32.gmra.mxu0 %v1462
    %v1517 = vpop.f32.mrf.mxu0
    %v1518 = vadd.f32 %v1498, %v1517
    %1519 = vdwg.mxu0
    %1520 = vmatpush.msra.mxu0 %v1495
    %1521 = vmatpush.msra.mxu0 %v1494
    %1522 = vmatpush.msra.mxu0 %v1493
    %1523 = vmatpush.msra.mxu0 %v1492
    %1524 = vmatpush.msra.mxu0 %v1491
    %1525 = vmatpush.msra.mxu0 %v1490
    %1526 = vmatpush.msra.mxu0 %v1489
    %1527 = vmatpush.msra.mxu0 %v1488
    %1528 = vmatpush.msra.mxu0 %v1487
    %1529 = vmatpush.msra.mxu0 %v1486
    %1530 = vmatpush.msra.mxu0 %v1485
    %1531 = vmatpush.msra.mxu0 %v1484
    %1532 = vmatpush.msra.mxu0 %v1483
    %1533 = vmatpush.msra.mxu0 %v1482
    %1534 = vmatpush.msra.mxu0 %v1481
    %1535 = vmatpush.msra.mxu0 %v1480
    %1536 = vmatmul.f32.gmra.mxu0 %v1463
    %v1537 = vpop.f32.mrf.mxu0
    %v1538 = vadd.f32 %v1518, %v1537
    %1539 = vdwg.mxu0
    %v1540 = vtanh.pop %v1538
    %1541 = vst [vmem:[#allocation14] sm:$0xff] %v1540
    // Predicated region
    $region74: #{tpu_custom_call.1} parent=1 // pred_check
      _
    $region75: #{tpu_custom_call.1} parent=1 // pred_check_branch
      %1543 = sbr.rel (0) target = $region77
    $region76: #{tpu_custom_call.1} parent=1 // pred_region
      %1545 = vsyncadd [#allocation4], 0
      %s1547 = sshll.u32 [#allocation14], 4
      %s1548 = int_to_ptr.vmem [resolvable:$true] %s1547
      %s1549 = sshll.u32 %s11, 4
      %s1550 = int_to_ptr.hbm [resolvable:$true] %s1549
      %1552 = dma.vmem_to_hbm [thread:$0]  %s1548, 128, %s1550, [#allocation4]
    $region77: #{tpu_custom_call.1} parent=1 // pred_fallthru
      _
    // Predicated region
    $region78: #{tpu_custom_call.1} parent=1 // pred_check
      _
    $region79: #{tpu_custom_call.1} parent=1 // pred_check_branch
      %1554 = sbr.rel (0) target = $region81
    $region80: #{tpu_custom_call.1} parent=1 // pred_region
      %1556 = dma.done [#allocation4], 128
    $region81: #{tpu_custom_call.1} parent=1 // pred_fallthru
      _
    %1557 = vsyncpa [#allocation3], 1
    %1558 = vsyncpa [#allocation6], 1
    %1559 = vsyncpa [#allocation9], 1
    %1560 = vsyncpa [#allocation12], 1
    %1561 = vsyncpa [#allocation4], 1

</llo_original>
